<compile_context>
chip_gen: v7x
topology: tpu7x:2x2x1
jax: 0.10.0
libtpu: 0.0.40
codegen_flags: <defaults>
</compile_context>

<pallas_src>
import functools

import jax
import jax.numpy as jnp
from jax.experimental import pallas as pl
from jax.experimental.pallas import tpu as pltpu


def _ensemble_emb_gather_kernel(ids_ref, table_hbm, out_ref, sems):
    # ids_ref:   (T,)       int32  SMEM (scalar-prefetched, shared by members)
    # table_hbm: (N, V, D)  dtype  HBM raw ref (no auto-DMA)
    # out_ref:   (1, T, D)  dtype  VMEM output block for member m
    # sems:      (T,)       DMA semaphores, one per in-flight row copy
    m = pl.program_id(0)
    n_tok = out_ref.shape[1]

    # Issue all T row-gather DMAs up front (statically unrolled: T is small at
    # decode time) so they all overlap each other; DMA dst is the output block
    # itself, so there is no staging buffer and no VMEM->VMEM copy.
    copies = []
    for t in range(n_tok):
        cp = pltpu.make_async_copy(
            table_hbm.at[m, ids_ref[t]],   # (D,) embedding row in HBM
            out_ref.at[0, t],              # (D,) row of the output block
            sems.at[t],
        )
        cp.start()
        copies.append(cp)
    # All gathers must land before the kernel body ends (then Pallas writes the
    # block back to HBM).
    for cp in copies:
        cp.wait()


@functools.partial(jax.jit, static_argnames=("n_models",))
def ensemble_tgt_emb(tgt, emb_tables, *, n_models):
    """tgt: (B, L) int32; emb_tables: (n_models, V, D).

    Returns a tuple of n_models arrays of shape (B, L, D), mirroring the
    list returned by EnsembleTgtEmb.forward.
    """
    B, L = tgt.shape
    n, V, D = emb_tables.shape
    assert n == n_models
    T = B * L
    ids = tgt.reshape(T).astype(jnp.int32)

    dtype = emb_tables.dtype
    itemsize = jnp.dtype(dtype).itemsize
    # Gather path: no flops; bytes = (read rows + write rows) + ids.
    cost = pl.CostEstimate(
        flops=0,
        transcendentals=0,
        bytes_accessed=int(2 * n_models * T * D * itemsize + T * 4),
    )

    out = pl.pallas_call(
        _ensemble_emb_gather_kernel,
        out_shape=jax.ShapeDtypeStruct((n_models, T, D), dtype),
        grid_spec=pltpu.PrefetchScalarGridSpec(
            num_scalar_prefetch=1,                         # ids -> SMEM
            grid=(n_models,),
            in_specs=[pl.BlockSpec(memory_space=pl.ANY)],  # tables stay in HBM
            out_specs=pl.BlockSpec((1, T, D), lambda m, ids: (m, 0, 0)),
            scratch_shapes=[
                pltpu.SemaphoreType.DMA((T,)),
            ],
        ),
        compiler_params=pltpu.CompilerParams(
            dimension_semantics=("parallel",)),
        cost_estimate=cost,
    )(ids, emb_tables)

    out = out.reshape(n_models, B, L, D)
    return tuple(out[m] for m in range(n_models))


if __name__ == "__main__":
    # Small, deterministic setup consistent with the module's forward.
    N_MODELS = 3          # ensemble size
    VOCAB = 64            # target vocabulary
    DIM = 128             # embedding dim
    B, L = 2, 8           # batch, decoded sequence length
    PAD_IDX = 1           # word_padding_idx

    key = jax.random.PRNGKey(0)
    k_tab, k_tgt = jax.random.split(key)

    # Per-model embedding tables; padding row is zero (as nn.Embedding does).
    emb_tables = 0.02 * jax.random.normal(
        k_tab, (N_MODELS, VOCAB, DIM), dtype=jnp.float32)
    emb_tables = emb_tables.at[:, PAD_IDX, :].set(0.0)

    # Target tokens (including some padding tokens).
    tgt = jax.random.randint(k_tgt, (B, L), 0, VOCAB, dtype=jnp.int32)
    tgt = tgt.at[0, -2:].set(PAD_IDX)

    outs = ensemble_tgt_emb(tgt, emb_tables, n_models=N_MODELS)
    outs = jax.block_until_ready(outs)

    # Cross-check against a plain-JAX reference (list of per-model lookups).
    for m in range(N_MODELS):
        ref = jnp.take(emb_tables[m], tgt, axis=0)   # (B, L, D)
        assert outs[m].shape == (B, L, DIM)
        assert jnp.array_equal(outs[m], ref), f"mismatch in model {m}"

    print("KERNEL_OK")
</pallas_src>

<mosaic_0001>
module attributes {stable_mosaic.version = 11 : i64} {
  func.func @_ensemble_emb_gather_kernel(%arg0: i32, %arg1: memref<16xi32, #tpu.memory_space<smem>>, %arg2: memref<3x64x128xf32, #tpu.memory_space<any>>, %arg3: memref<1x16x128xf32, #tpu.memory_space<vmem>>, %arg4: memref<16x!tpu.dma_semaphore, #tpu.memory_space<semaphore_mem>>) attributes {dimension_semantics = [#tpu.dimension_semantics<parallel>], iteration_bounds = array<i64: 3>, scalar_prefetch = 1 : i64, scratch_operands = 1 : i64, tpu.core_type = #tpu.core_type<tc>, window_params = [{}, {transform_indices = @transform_1, window_bounds = array<i64: 1, 16, 128>}]} {
    %c0 = arith.constant 0 : index
    %0 = memref.load %arg1[%c0] : memref<16xi32, #tpu.memory_space<smem>>
    %c0_i32 = arith.constant 0 : i32
    %c0_i32_0 = arith.constant 0 : i32
    %c0_i32_1 = arith.constant 0 : i32
    %c0_i32_2 = arith.constant 0 : i32
    %1 = tpu.memref_slice %arg2[%arg0, %0, %c0_i32_2] : memref<3x64x128xf32, #tpu.memory_space<any>> -> memref<1x1x128xf32, #tpu.memory_space<any>>
    %2 = tpu.memref_squeeze %1 : memref<1x1x128xf32, #tpu.memory_space<any>> -> memref<128xf32, #tpu.memory_space<any>>
    %c0_i32_3 = arith.constant 0 : i32
    %3 = tpu.memref_slice %arg3[%c0_i32, %c0_i32_0, %c0_i32_3] : memref<1x16x128xf32, #tpu.memory_space<vmem>> -> memref<1x1x128xf32, #tpu.memory_space<vmem>>
    %4 = tpu.memref_squeeze %3 : memref<1x1x128xf32, #tpu.memory_space<vmem>> -> memref<128xf32, #tpu.memory_space<vmem>>
    %5 = tpu.memref_slice %arg4[%c0_i32_1] : memref<16x!tpu.dma_semaphore, #tpu.memory_space<semaphore_mem>> -> memref<1x!tpu.dma_semaphore, #tpu.memory_space<semaphore_mem>>
    %6 = tpu.memref_squeeze %5 : memref<1x!tpu.dma_semaphore, #tpu.memory_space<semaphore_mem>> -> memref<!tpu.dma_semaphore, #tpu.memory_space<semaphore_mem>>
    tpu.enqueue_dma source(%2 : memref<128xf32, #tpu.memory_space<any>>) target(%4 : memref<128xf32, #tpu.memory_space<vmem>>) target_semaphore(%6 : memref<!tpu.dma_semaphore, #tpu.memory_space<semaphore_mem>>)
    %c1 = arith.constant 1 : index
    %7 = memref.load %arg1[%c1] : memref<16xi32, #tpu.memory_space<smem>>
    %c0_i32_4 = arith.constant 0 : i32
    %c1_i32 = arith.constant 1 : i32
    %c1_i32_5 = arith.constant 1 : i32
    %c0_i32_6 = arith.constant 0 : i32
    %8 = tpu.memref_slice %arg2[%arg0, %7, %c0_i32_6] : memref<3x64x128xf32, #tpu.memory_space<any>> -> memref<1x1x128xf32, #tpu.memory_space<any>>
    %9 = tpu.memref_squeeze %8 : memref<1x1x128xf32, #tpu.memory_space<any>> -> memref<128xf32, #tpu.memory_space<any>>
    %c0_i32_7 = arith.constant 0 : i32
    %10 = tpu.memref_slice %arg3[%c0_i32_4, %c1_i32, %c0_i32_7] : memref<1x16x128xf32, #tpu.memory_space<vmem>> -> memref<1x1x128xf32, #tpu.memory_space<vmem>>
    %11 = tpu.memref_squeeze %10 : memref<1x1x128xf32, #tpu.memory_space<vmem>> -> memref<128xf32, #tpu.memory_space<vmem>>
    %12 = tpu.memref_slice %arg4[%c1_i32_5] : memref<16x!tpu.dma_semaphore, #tpu.memory_space<semaphore_mem>> -> memref<1x!tpu.dma_semaphore, #tpu.memory_space<semaphore_mem>>
    %13 = tpu.memref_squeeze %12 : memref<1x!tpu.dma_semaphore, #tpu.memory_space<semaphore_mem>> -> memref<!tpu.dma_semaphore, #tpu.memory_space<semaphore_mem>>
    tpu.enqueue_dma source(%9 : memref<128xf32, #tpu.memory_space<any>>) target(%11 : memref<128xf32, #tpu.memory_space<vmem>>) target_semaphore(%13 : memref<!tpu.dma_semaphore, #tpu.memory_space<semaphore_mem>>)
    %c2 = arith.constant 2 : index
    %14 = memref.load %arg1[%c2] : memref<16xi32, #tpu.memory_space<smem>>
    %c0_i32_8 = arith.constant 0 : i32
    %c2_i32 = arith.constant 2 : i32
    %c2_i32_9 = arith.constant 2 : i32
    %c0_i32_10 = arith.constant 0 : i32
    %15 = tpu.memref_slice %arg2[%arg0, %14, %c0_i32_10] : memref<3x64x128xf32, #tpu.memory_space<any>> -> memref<1x1x128xf32, #tpu.memory_space<any>>
    %16 = tpu.memref_squeeze %15 : memref<1x1x128xf32, #tpu.memory_space<any>> -> memref<128xf32, #tpu.memory_space<any>>
    %c0_i32_11 = arith.constant 0 : i32
    %17 = tpu.memref_slice %arg3[%c0_i32_8, %c2_i32, %c0_i32_11] : memref<1x16x128xf32, #tpu.memory_space<vmem>> -> memref<1x1x128xf32, #tpu.memory_space<vmem>>
    %18 = tpu.memref_squeeze %17 : memref<1x1x128xf32, #tpu.memory_space<vmem>> -> memref<128xf32, #tpu.memory_space<vmem>>
    %19 = tpu.memref_slice %arg4[%c2_i32_9] : memref<16x!tpu.dma_semaphore, #tpu.memory_space<semaphore_mem>> -> memref<1x!tpu.dma_semaphore, #tpu.memory_space<semaphore_mem>>
    %20 = tpu.memref_squeeze %19 : memref<1x!tpu.dma_semaphore, #tpu.memory_space<semaphore_mem>> -> memref<!tpu.dma_semaphore, #tpu.memory_space<semaphore_mem>>
    tpu.enqueue_dma source(%16 : memref<128xf32, #tpu.memory_space<any>>) target(%18 : memref<128xf32, #tpu.memory_space<vmem>>) target_semaphore(%20 : memref<!tpu.dma_semaphore, #tpu.memory_space<semaphore_mem>>)
    %c3 = arith.constant 3 : index
    %21 = memref.load %arg1[%c3] : memref<16xi32, #tpu.memory_space<smem>>
    %c0_i32_12 = arith.constant 0 : i32
    %c3_i32 = arith.constant 3 : i32
    %c3_i32_13 = arith.constant 3 : i32
    %c0_i32_14 = arith.constant 0 : i32
    %22 = tpu.memref_slice %arg2[%arg0, %21, %c0_i32_14] : memref<3x64x128xf32, #tpu.memory_space<any>> -> memref<1x1x128xf32, #tpu.memory_space<any>>
    %23 = tpu.memref_squeeze %22 : memref<1x1x128xf32, #tpu.memory_space<any>> -> memref<128xf32, #tpu.memory_space<any>>
    %c0_i32_15 = arith.constant 0 : i32
    %24 = tpu.memref_slice %arg3[%c0_i32_12, %c3_i32, %c0_i32_15] : memref<1x16x128xf32, #tpu.memory_space<vmem>> -> memref<1x1x128xf32, #tpu.memory_space<vmem>>
    %25 = tpu.memref_squeeze %24 : memref<1x1x128xf32, #tpu.memory_space<vmem>> -> memref<128xf32, #tpu.memory_space<vmem>>
    %26 = tpu.memref_slice %arg4[%c3_i32_13] : memref<16x!tpu.dma_semaphore, #tpu.memory_space<semaphore_mem>> -> memref<1x!tpu.dma_semaphore, #tpu.memory_space<semaphore_mem>>
    %27 = tpu.memref_squeeze %26 : memref<1x!tpu.dma_semaphore, #tpu.memory_space<semaphore_mem>> -> memref<!tpu.dma_semaphore, #tpu.memory_space<semaphore_mem>>
    tpu.enqueue_dma source(%23 : memref<128xf32, #tpu.memory_space<any>>) target(%25 : memref<128xf32, #tpu.memory_space<vmem>>) target_semaphore(%27 : memref<!tpu.dma_semaphore, #tpu.memory_space<semaphore_mem>>)
    %c4 = arith.constant 4 : index
    %28 = memref.load %arg1[%c4] : memref<16xi32, #tpu.memory_space<smem>>
    %c0_i32_16 = arith.constant 0 : i32
    %c4_i32 = arith.constant 4 : i32
    %c4_i32_17 = arith.constant 4 : i32
    %c0_i32_18 = arith.constant 0 : i32
    %29 = tpu.memref_slice %arg2[%arg0, %28, %c0_i32_18] : memref<3x64x128xf32, #tpu.memory_space<any>> -> memref<1x1x128xf32, #tpu.memory_space<any>>
    %30 = tpu.memref_squeeze %29 : memref<1x1x128xf32, #tpu.memory_space<any>> -> memref<128xf32, #tpu.memory_space<any>>
    %c0_i32_19 = arith.constant 0 : i32
    %31 = tpu.memref_slice %arg3[%c0_i32_16, %c4_i32, %c0_i32_19] : memref<1x16x128xf32, #tpu.memory_space<vmem>> -> memref<1x1x128xf32, #tpu.memory_space<vmem>>
    %32 = tpu.memref_squeeze %31 : memref<1x1x128xf32, #tpu.memory_space<vmem>> -> memref<128xf32, #tpu.memory_space<vmem>>
    %33 = tpu.memref_slice %arg4[%c4_i32_17] : memref<16x!tpu.dma_semaphore, #tpu.memory_space<semaphore_mem>> -> memref<1x!tpu.dma_semaphore, #tpu.memory_space<semaphore_mem>>
    %34 = tpu.memref_squeeze %33 : memref<1x!tpu.dma_semaphore, #tpu.memory_space<semaphore_mem>> -> memref<!tpu.dma_semaphore, #tpu.memory_space<semaphore_mem>>
    tpu.enqueue_dma source(%30 : memref<128xf32, #tpu.memory_space<any>>) target(%32 : memref<128xf32, #tpu.memory_space<vmem>>) target_semaphore(%34 : memref<!tpu.dma_semaphore, #tpu.memory_space<semaphore_mem>>)
    %c5 = arith.constant 5 : index
    %35 = memref.load %arg1[%c5] : memref<16xi32, #tpu.memory_space<smem>>
    %c0_i32_20 = arith.constant 0 : i32
    %c5_i32 = arith.constant 5 : i32
    %c5_i32_21 = arith.constant 5 : i32
    %c0_i32_22 = arith.constant 0 : i32
    %36 = tpu.memref_slice %arg2[%arg0, %35, %c0_i32_22] : memref<3x64x128xf32, #tpu.memory_space<any>> -> memref<1x1x128xf32, #tpu.memory_space<any>>
    %37 = tpu.memref_squeeze %36 : memref<1x1x128xf32, #tpu.memory_space<any>> -> memref<128xf32, #tpu.memory_space<any>>
    %c0_i32_23 = arith.constant 0 : i32
    %38 = tpu.memref_slice %arg3[%c0_i32_20, %c5_i32, %c0_i32_23] : memref<1x16x128xf32, #tpu.memory_space<vmem>> -> memref<1x1x128xf32, #tpu.memory_space<vmem>>
    %39 = tpu.memref_squeeze %38 : memref<1x1x128xf32, #tpu.memory_space<vmem>> -> memref<128xf32, #tpu.memory_space<vmem>>
    %40 = tpu.memref_slice %arg4[%c5_i32_21] : memref<16x!tpu.dma_semaphore, #tpu.memory_space<semaphore_mem>> -> memref<1x!tpu.dma_semaphore, #tpu.memory_space<semaphore_mem>>
    %41 = tpu.memref_squeeze %40 : memref<1x!tpu.dma_semaphore, #tpu.memory_space<semaphore_mem>> -> memref<!tpu.dma_semaphore, #tpu.memory_space<semaphore_mem>>
    tpu.enqueue_dma source(%37 : memref<128xf32, #tpu.memory_space<any>>) target(%39 : memref<128xf32, #tpu.memory_space<vmem>>) target_semaphore(%41 : memref<!tpu.dma_semaphore, #tpu.memory_space<semaphore_mem>>)
    %c6 = arith.constant 6 : index
    %42 = memref.load %arg1[%c6] : memref<16xi32, #tpu.memory_space<smem>>
    %c0_i32_24 = arith.constant 0 : i32
    %c6_i32 = arith.constant 6 : i32
    %c6_i32_25 = arith.constant 6 : i32
    %c0_i32_26 = arith.constant 0 : i32
    %43 = tpu.memref_slice %arg2[%arg0, %42, %c0_i32_26] : memref<3x64x128xf32, #tpu.memory_space<any>> -> memref<1x1x128xf32, #tpu.memory_space<any>>
    %44 = tpu.memref_squeeze %43 : memref<1x1x128xf32, #tpu.memory_space<any>> -> memref<128xf32, #tpu.memory_space<any>>
    %c0_i32_27 = arith.constant 0 : i32
    %45 = tpu.memref_slice %arg3[%c0_i32_24, %c6_i32, %c0_i32_27] : memref<1x16x128xf32, #tpu.memory_space<vmem>> -> memref<1x1x128xf32, #tpu.memory_space<vmem>>
    %46 = tpu.memref_squeeze %45 : memref<1x1x128xf32, #tpu.memory_space<vmem>> -> memref<128xf32, #tpu.memory_space<vmem>>
    %47 = tpu.memref_slice %arg4[%c6_i32_25] : memref<16x!tpu.dma_semaphore, #tpu.memory_space<semaphore_mem>> -> memref<1x!tpu.dma_semaphore, #tpu.memory_space<semaphore_mem>>
    %48 = tpu.memref_squeeze %47 : memref<1x!tpu.dma_semaphore, #tpu.memory_space<semaphore_mem>> -> memref<!tpu.dma_semaphore, #tpu.memory_space<semaphore_mem>>
    tpu.enqueue_dma source(%44 : memref<128xf32, #tpu.memory_space<any>>) target(%46 : memref<128xf32, #tpu.memory_space<vmem>>) target_semaphore(%48 : memref<!tpu.dma_semaphore, #tpu.memory_space<semaphore_mem>>)
    %c7 = arith.constant 7 : index
    %49 = memref.load %arg1[%c7] : memref<16xi32, #tpu.memory_space<smem>>
    %c0_i32_28 = arith.constant 0 : i32
    %c7_i32 = arith.constant 7 : i32
    %c7_i32_29 = arith.constant 7 : i32
    %c0_i32_30 = arith.constant 0 : i32
    %50 = tpu.memref_slice %arg2[%arg0, %49, %c0_i32_30] : memref<3x64x128xf32, #tpu.memory_space<any>> -> memref<1x1x128xf32, #tpu.memory_space<any>>
    %51 = tpu.memref_squeeze %50 : memref<1x1x128xf32, #tpu.memory_space<any>> -> memref<128xf32, #tpu.memory_space<any>>
    %c0_i32_31 = arith.constant 0 : i32
    %52 = tpu.memref_slice %arg3[%c0_i32_28, %c7_i32, %c0_i32_31] : memref<1x16x128xf32, #tpu.memory_space<vmem>> -> memref<1x1x128xf32, #tpu.memory_space<vmem>>
    %53 = tpu.memref_squeeze %52 : memref<1x1x128xf32, #tpu.memory_space<vmem>> -> memref<128xf32, #tpu.memory_space<vmem>>
    %54 = tpu.memref_slice %arg4[%c7_i32_29] : memref<16x!tpu.dma_semaphore, #tpu.memory_space<semaphore_mem>> -> memref<1x!tpu.dma_semaphore, #tpu.memory_space<semaphore_mem>>
    %55 = tpu.memref_squeeze %54 : memref<1x!tpu.dma_semaphore, #tpu.memory_space<semaphore_mem>> -> memref<!tpu.dma_semaphore, #tpu.memory_space<semaphore_mem>>
    tpu.enqueue_dma source(%51 : memref<128xf32, #tpu.memory_space<any>>) target(%53 : memref<128xf32, #tpu.memory_space<vmem>>) target_semaphore(%55 : memref<!tpu.dma_semaphore, #tpu.memory_space<semaphore_mem>>)
    %c8 = arith.constant 8 : index
    %56 = memref.load %arg1[%c8] : memref<16xi32, #tpu.memory_space<smem>>
    %c0_i32_32 = arith.constant 0 : i32
    %c8_i32 = arith.constant 8 : i32
    %c8_i32_33 = arith.constant 8 : i32
    %c0_i32_34 = arith.constant 0 : i32
    %57 = tpu.memref_slice %arg2[%arg0, %56, %c0_i32_34] : memref<3x64x128xf32, #tpu.memory_space<any>> -> memref<1x1x128xf32, #tpu.memory_space<any>>
    %58 = tpu.memref_squeeze %57 : memref<1x1x128xf32, #tpu.memory_space<any>> -> memref<128xf32, #tpu.memory_space<any>>
    %c0_i32_35 = arith.constant 0 : i32
    %59 = tpu.memref_slice %arg3[%c0_i32_32, %c8_i32, %c0_i32_35] : memref<1x16x128xf32, #tpu.memory_space<vmem>> -> memref<1x1x128xf32, #tpu.memory_space<vmem>>
    %60 = tpu.memref_squeeze %59 : memref<1x1x128xf32, #tpu.memory_space<vmem>> -> memref<128xf32, #tpu.memory_space<vmem>>
    %61 = tpu.memref_slice %arg4[%c8_i32_33] : memref<16x!tpu.dma_semaphore, #tpu.memory_space<semaphore_mem>> -> memref<1x!tpu.dma_semaphore, #tpu.memory_space<semaphore_mem>>
    %62 = tpu.memref_squeeze %61 : memref<1x!tpu.dma_semaphore, #tpu.memory_space<semaphore_mem>> -> memref<!tpu.dma_semaphore, #tpu.memory_space<semaphore_mem>>
    tpu.enqueue_dma source(%58 : memref<128xf32, #tpu.memory_space<any>>) target(%60 : memref<128xf32, #tpu.memory_space<vmem>>) target_semaphore(%62 : memref<!tpu.dma_semaphore, #tpu.memory_space<semaphore_mem>>)
    %c9 = arith.constant 9 : index
    %63 = memref.load %arg1[%c9] : memref<16xi32, #tpu.memory_space<smem>>
    %c0_i32_36 = arith.constant 0 : i32
    %c9_i32 = arith.constant 9 : i32
    %c9_i32_37 = arith.constant 9 : i32
    %c0_i32_38 = arith.constant 0 : i32
    %64 = tpu.memref_slice %arg2[%arg0, %63, %c0_i32_38] : memref<3x64x128xf32, #tpu.memory_space<any>> -> memref<1x1x128xf32, #tpu.memory_space<any>>
    %65 = tpu.memref_squeeze %64 : memref<1x1x128xf32, #tpu.memory_space<any>> -> memref<128xf32, #tpu.memory_space<any>>
    %c0_i32_39 = arith.constant 0 : i32
    %66 = tpu.memref_slice %arg3[%c0_i32_36, %c9_i32, %c0_i32_39] : memref<1x16x128xf32, #tpu.memory_space<vmem>> -> memref<1x1x128xf32, #tpu.memory_space<vmem>>
    %67 = tpu.memref_squeeze %66 : memref<1x1x128xf32, #tpu.memory_space<vmem>> -> memref<128xf32, #tpu.memory_space<vmem>>
    %68 = tpu.memref_slice %arg4[%c9_i32_37] : memref<16x!tpu.dma_semaphore, #tpu.memory_space<semaphore_mem>> -> memref<1x!tpu.dma_semaphore, #tpu.memory_space<semaphore_mem>>
    %69 = tpu.memref_squeeze %68 : memref<1x!tpu.dma_semaphore, #tpu.memory_space<semaphore_mem>> -> memref<!tpu.dma_semaphore, #tpu.memory_space<semaphore_mem>>
    tpu.enqueue_dma source(%65 : memref<128xf32, #tpu.memory_space<any>>) target(%67 : memref<128xf32, #tpu.memory_space<vmem>>) target_semaphore(%69 : memref<!tpu.dma_semaphore, #tpu.memory_space<semaphore_mem>>)
    %c10 = arith.constant 10 : index
    %70 = memref.load %arg1[%c10] : memref<16xi32, #tpu.memory_space<smem>>
    %c0_i32_40 = arith.constant 0 : i32
    %c10_i32 = arith.constant 10 : i32
    %c10_i32_41 = arith.constant 10 : i32
    %c0_i32_42 = arith.constant 0 : i32
    %71 = tpu.memref_slice %arg2[%arg0, %70, %c0_i32_42] : memref<3x64x128xf32, #tpu.memory_space<any>> -> memref<1x1x128xf32, #tpu.memory_space<any>>
    %72 = tpu.memref_squeeze %71 : memref<1x1x128xf32, #tpu.memory_space<any>> -> memref<128xf32, #tpu.memory_space<any>>
    %c0_i32_43 = arith.constant 0 : i32
    %73 = tpu.memref_slice %arg3[%c0_i32_40, %c10_i32, %c0_i32_43] : memref<1x16x128xf32, #tpu.memory_space<vmem>> -> memref<1x1x128xf32, #tpu.memory_space<vmem>>
    %74 = tpu.memref_squeeze %73 : memref<1x1x128xf32, #tpu.memory_space<vmem>> -> memref<128xf32, #tpu.memory_space<vmem>>
    %75 = tpu.memref_slice %arg4[%c10_i32_41] : memref<16x!tpu.dma_semaphore, #tpu.memory_space<semaphore_mem>> -> memref<1x!tpu.dma_semaphore, #tpu.memory_space<semaphore_mem>>
    %76 = tpu.memref_squeeze %75 : memref<1x!tpu.dma_semaphore, #tpu.memory_space<semaphore_mem>> -> memref<!tpu.dma_semaphore, #tpu.memory_space<semaphore_mem>>
    tpu.enqueue_dma source(%72 : memref<128xf32, #tpu.memory_space<any>>) target(%74 : memref<128xf32, #tpu.memory_space<vmem>>) target_semaphore(%76 : memref<!tpu.dma_semaphore, #tpu.memory_space<semaphore_mem>>)
    %c11 = arith.constant 11 : index
    %77 = memref.load %arg1[%c11] : memref<16xi32, #tpu.memory_space<smem>>
    %c0_i32_44 = arith.constant 0 : i32
    %c11_i32 = arith.constant 11 : i32
    %c11_i32_45 = arith.constant 11 : i32
    %c0_i32_46 = arith.constant 0 : i32
    %78 = tpu.memref_slice %arg2[%arg0, %77, %c0_i32_46] : memref<3x64x128xf32, #tpu.memory_space<any>> -> memref<1x1x128xf32, #tpu.memory_space<any>>
    %79 = tpu.memref_squeeze %78 : memref<1x1x128xf32, #tpu.memory_space<any>> -> memref<128xf32, #tpu.memory_space<any>>
    %c0_i32_47 = arith.constant 0 : i32
    %80 = tpu.memref_slice %arg3[%c0_i32_44, %c11_i32, %c0_i32_47] : memref<1x16x128xf32, #tpu.memory_space<vmem>> -> memref<1x1x128xf32, #tpu.memory_space<vmem>>
    %81 = tpu.memref_squeeze %80 : memref<1x1x128xf32, #tpu.memory_space<vmem>> -> memref<128xf32, #tpu.memory_space<vmem>>
    %82 = tpu.memref_slice %arg4[%c11_i32_45] : memref<16x!tpu.dma_semaphore, #tpu.memory_space<semaphore_mem>> -> memref<1x!tpu.dma_semaphore, #tpu.memory_space<semaphore_mem>>
    %83 = tpu.memref_squeeze %82 : memref<1x!tpu.dma_semaphore, #tpu.memory_space<semaphore_mem>> -> memref<!tpu.dma_semaphore, #tpu.memory_space<semaphore_mem>>
    tpu.enqueue_dma source(%79 : memref<128xf32, #tpu.memory_space<any>>) target(%81 : memref<128xf32, #tpu.memory_space<vmem>>) target_semaphore(%83 : memref<!tpu.dma_semaphore, #tpu.memory_space<semaphore_mem>>)
    %c12 = arith.constant 12 : index
    %84 = memref.load %arg1[%c12] : memref<16xi32, #tpu.memory_space<smem>>
    %c0_i32_48 = arith.constant 0 : i32
    %c12_i32 = arith.constant 12 : i32
    %c12_i32_49 = arith.constant 12 : i32
    %c0_i32_50 = arith.constant 0 : i32
    %85 = tpu.memref_slice %arg2[%arg0, %84, %c0_i32_50] : memref<3x64x128xf32, #tpu.memory_space<any>> -> memref<1x1x128xf32, #tpu.memory_space<any>>
    %86 = tpu.memref_squeeze %85 : memref<1x1x128xf32, #tpu.memory_space<any>> -> memref<128xf32, #tpu.memory_space<any>>
    %c0_i32_51 = arith.constant 0 : i32
    %87 = tpu.memref_slice %arg3[%c0_i32_48, %c12_i32, %c0_i32_51] : memref<1x16x128xf32, #tpu.memory_space<vmem>> -> memref<1x1x128xf32, #tpu.memory_space<vmem>>
    %88 = tpu.memref_squeeze %87 : memref<1x1x128xf32, #tpu.memory_space<vmem>> -> memref<128xf32, #tpu.memory_space<vmem>>
    %89 = tpu.memref_slice %arg4[%c12_i32_49] : memref<16x!tpu.dma_semaphore, #tpu.memory_space<semaphore_mem>> -> memref<1x!tpu.dma_semaphore, #tpu.memory_space<semaphore_mem>>
    %90 = tpu.memref_squeeze %89 : memref<1x!tpu.dma_semaphore, #tpu.memory_space<semaphore_mem>> -> memref<!tpu.dma_semaphore, #tpu.memory_space<semaphore_mem>>
    tpu.enqueue_dma source(%86 : memref<128xf32, #tpu.memory_space<any>>) target(%88 : memref<128xf32, #tpu.memory_space<vmem>>) target_semaphore(%90 : memref<!tpu.dma_semaphore, #tpu.memory_space<semaphore_mem>>)
    %c13 = arith.constant 13 : index
    %91 = memref.load %arg1[%c13] : memref<16xi32, #tpu.memory_space<smem>>
    %c0_i32_52 = arith.constant 0 : i32
    %c13_i32 = arith.constant 13 : i32
    %c13_i32_53 = arith.constant 13 : i32
    %c0_i32_54 = arith.constant 0 : i32
    %92 = tpu.memref_slice %arg2[%arg0, %91, %c0_i32_54] : memref<3x64x128xf32, #tpu.memory_space<any>> -> memref<1x1x128xf32, #tpu.memory_space<any>>
    %93 = tpu.memref_squeeze %92 : memref<1x1x128xf32, #tpu.memory_space<any>> -> memref<128xf32, #tpu.memory_space<any>>
    %c0_i32_55 = arith.constant 0 : i32
    %94 = tpu.memref_slice %arg3[%c0_i32_52, %c13_i32, %c0_i32_55] : memref<1x16x128xf32, #tpu.memory_space<vmem>> -> memref<1x1x128xf32, #tpu.memory_space<vmem>>
    %95 = tpu.memref_squeeze %94 : memref<1x1x128xf32, #tpu.memory_space<vmem>> -> memref<128xf32, #tpu.memory_space<vmem>>
    %96 = tpu.memref_slice %arg4[%c13_i32_53] : memref<16x!tpu.dma_semaphore, #tpu.memory_space<semaphore_mem>> -> memref<1x!tpu.dma_semaphore, #tpu.memory_space<semaphore_mem>>
    %97 = tpu.memref_squeeze %96 : memref<1x!tpu.dma_semaphore, #tpu.memory_space<semaphore_mem>> -> memref<!tpu.dma_semaphore, #tpu.memory_space<semaphore_mem>>
    tpu.enqueue_dma source(%93 : memref<128xf32, #tpu.memory_space<any>>) target(%95 : memref<128xf32, #tpu.memory_space<vmem>>) target_semaphore(%97 : memref<!tpu.dma_semaphore, #tpu.memory_space<semaphore_mem>>)
    %c14 = arith.constant 14 : index
    %98 = memref.load %arg1[%c14] : memref<16xi32, #tpu.memory_space<smem>>
    %c0_i32_56 = arith.constant 0 : i32
    %c14_i32 = arith.constant 14 : i32
    %c14_i32_57 = arith.constant 14 : i32
    %c0_i32_58 = arith.constant 0 : i32
    %99 = tpu.memref_slice %arg2[%arg0, %98, %c0_i32_58] : memref<3x64x128xf32, #tpu.memory_space<any>> -> memref<1x1x128xf32, #tpu.memory_space<any>>
    %100 = tpu.memref_squeeze %99 : memref<1x1x128xf32, #tpu.memory_space<any>> -> memref<128xf32, #tpu.memory_space<any>>
    %c0_i32_59 = arith.constant 0 : i32
    %101 = tpu.memref_slice %arg3[%c0_i32_56, %c14_i32, %c0_i32_59] : memref<1x16x128xf32, #tpu.memory_space<vmem>> -> memref<1x1x128xf32, #tpu.memory_space<vmem>>
    %102 = tpu.memref_squeeze %101 : memref<1x1x128xf32, #tpu.memory_space<vmem>> -> memref<128xf32, #tpu.memory_space<vmem>>
    %103 = tpu.memref_slice %arg4[%c14_i32_57] : memref<16x!tpu.dma_semaphore, #tpu.memory_space<semaphore_mem>> -> memref<1x!tpu.dma_semaphore, #tpu.memory_space<semaphore_mem>>
    %104 = tpu.memref_squeeze %103 : memref<1x!tpu.dma_semaphore, #tpu.memory_space<semaphore_mem>> -> memref<!tpu.dma_semaphore, #tpu.memory_space<semaphore_mem>>
    tpu.enqueue_dma source(%100 : memref<128xf32, #tpu.memory_space<any>>) target(%102 : memref<128xf32, #tpu.memory_space<vmem>>) target_semaphore(%104 : memref<!tpu.dma_semaphore, #tpu.memory_space<semaphore_mem>>)
    %c15 = arith.constant 15 : index
    %105 = memref.load %arg1[%c15] : memref<16xi32, #tpu.memory_space<smem>>
    %c0_i32_60 = arith.constant 0 : i32
    %c15_i32 = arith.constant 15 : i32
    %c15_i32_61 = arith.constant 15 : i32
    %c0_i32_62 = arith.constant 0 : i32
    %106 = tpu.memref_slice %arg2[%arg0, %105, %c0_i32_62] : memref<3x64x128xf32, #tpu.memory_space<any>> -> memref<1x1x128xf32, #tpu.memory_space<any>>
    %107 = tpu.memref_squeeze %106 : memref<1x1x128xf32, #tpu.memory_space<any>> -> memref<128xf32, #tpu.memory_space<any>>
    %c0_i32_63 = arith.constant 0 : i32
    %108 = tpu.memref_slice %arg3[%c0_i32_60, %c15_i32, %c0_i32_63] : memref<1x16x128xf32, #tpu.memory_space<vmem>> -> memref<1x1x128xf32, #tpu.memory_space<vmem>>
    %109 = tpu.memref_squeeze %108 : memref<1x1x128xf32, #tpu.memory_space<vmem>> -> memref<128xf32, #tpu.memory_space<vmem>>
    %110 = tpu.memref_slice %arg4[%c15_i32_61] : memref<16x!tpu.dma_semaphore, #tpu.memory_space<semaphore_mem>> -> memref<1x!tpu.dma_semaphore, #tpu.memory_space<semaphore_mem>>
    %111 = tpu.memref_squeeze %110 : memref<1x!tpu.dma_semaphore, #tpu.memory_space<semaphore_mem>> -> memref<!tpu.dma_semaphore, #tpu.memory_space<semaphore_mem>>
    tpu.enqueue_dma source(%107 : memref<128xf32, #tpu.memory_space<any>>) target(%109 : memref<128xf32, #tpu.memory_space<vmem>>) target_semaphore(%111 : memref<!tpu.dma_semaphore, #tpu.memory_space<semaphore_mem>>)
    %c0_i32_64 = arith.constant 0 : i32
    %c0_i32_65 = arith.constant 0 : i32
    %c0_i32_66 = arith.constant 0 : i32
    %c0_i32_67 = arith.constant 0 : i32
    %112 = tpu.memref_slice %arg2[%arg0, %0, %c0_i32_67] : memref<3x64x128xf32, #tpu.memory_space<any>> -> memref<1x1x128xf32, #tpu.memory_space<any>>
    %113 = tpu.memref_squeeze %112 : memref<1x1x128xf32, #tpu.memory_space<any>> -> memref<128xf32, #tpu.memory_space<any>>
    %c0_i32_68 = arith.constant 0 : i32
    %114 = tpu.memref_slice %arg3[%c0_i32_64, %c0_i32_65, %c0_i32_68] : memref<1x16x128xf32, #tpu.memory_space<vmem>> -> memref<1x1x128xf32, #tpu.memory_space<vmem>>
    %115 = tpu.memref_squeeze %114 : memref<1x1x128xf32, #tpu.memory_space<vmem>> -> memref<128xf32, #tpu.memory_space<vmem>>
    %116 = tpu.memref_slice %arg4[%c0_i32_66] : memref<16x!tpu.dma_semaphore, #tpu.memory_space<semaphore_mem>> -> memref<1x!tpu.dma_semaphore, #tpu.memory_space<semaphore_mem>>
    %117 = tpu.memref_squeeze %116 : memref<1x!tpu.dma_semaphore, #tpu.memory_space<semaphore_mem>> -> memref<!tpu.dma_semaphore, #tpu.memory_space<semaphore_mem>>
    tpu.wait_dma2 semaphore(%117 : memref<!tpu.dma_semaphore, #tpu.memory_space<semaphore_mem>>) src(%113 : memref<128xf32, #tpu.memory_space<any>>) dst(%115 : memref<128xf32, #tpu.memory_space<vmem>>)
    %c0_i32_69 = arith.constant 0 : i32
    %c1_i32_70 = arith.constant 1 : i32
    %c1_i32_71 = arith.constant 1 : i32
    %c0_i32_72 = arith.constant 0 : i32
    %118 = tpu.memref_slice %arg2[%arg0, %7, %c0_i32_72] : memref<3x64x128xf32, #tpu.memory_space<any>> -> memref<1x1x128xf32, #tpu.memory_space<any>>
    %119 = tpu.memref_squeeze %118 : memref<1x1x128xf32, #tpu.memory_space<any>> -> memref<128xf32, #tpu.memory_space<any>>
    %c0_i32_73 = arith.constant 0 : i32
    %120 = tpu.memref_slice %arg3[%c0_i32_69, %c1_i32_70, %c0_i32_73] : memref<1x16x128xf32, #tpu.memory_space<vmem>> -> memref<1x1x128xf32, #tpu.memory_space<vmem>>
    %121 = tpu.memref_squeeze %120 : memref<1x1x128xf32, #tpu.memory_space<vmem>> -> memref<128xf32, #tpu.memory_space<vmem>>
    %122 = tpu.memref_slice %arg4[%c1_i32_71] : memref<16x!tpu.dma_semaphore, #tpu.memory_space<semaphore_mem>> -> memref<1x!tpu.dma_semaphore, #tpu.memory_space<semaphore_mem>>
    %123 = tpu.memref_squeeze %122 : memref<1x!tpu.dma_semaphore, #tpu.memory_space<semaphore_mem>> -> memref<!tpu.dma_semaphore, #tpu.memory_space<semaphore_mem>>
    tpu.wait_dma2 semaphore(%123 : memref<!tpu.dma_semaphore, #tpu.memory_space<semaphore_mem>>) src(%119 : memref<128xf32, #tpu.memory_space<any>>) dst(%121 : memref<128xf32, #tpu.memory_space<vmem>>)
    %c0_i32_74 = arith.constant 0 : i32
    %c2_i32_75 = arith.constant 2 : i32
    %c2_i32_76 = arith.constant 2 : i32
    %c0_i32_77 = arith.constant 0 : i32
    %124 = tpu.memref_slice %arg2[%arg0, %14, %c0_i32_77] : memref<3x64x128xf32, #tpu.memory_space<any>> -> memref<1x1x128xf32, #tpu.memory_space<any>>
    %125 = tpu.memref_squeeze %124 : memref<1x1x128xf32, #tpu.memory_space<any>> -> memref<128xf32, #tpu.memory_space<any>>
    %c0_i32_78 = arith.constant 0 : i32
    %126 = tpu.memref_slice %arg3[%c0_i32_74, %c2_i32_75, %c0_i32_78] : memref<1x16x128xf32, #tpu.memory_space<vmem>> -> memref<1x1x128xf32, #tpu.memory_space<vmem>>
    %127 = tpu.memref_squeeze %126 : memref<1x1x128xf32, #tpu.memory_space<vmem>> -> memref<128xf32, #tpu.memory_space<vmem>>
    %128 = tpu.memref_slice %arg4[%c2_i32_76] : memref<16x!tpu.dma_semaphore, #tpu.memory_space<semaphore_mem>> -> memref<1x!tpu.dma_semaphore, #tpu.memory_space<semaphore_mem>>
    %129 = tpu.memref_squeeze %128 : memref<1x!tpu.dma_semaphore, #tpu.memory_space<semaphore_mem>> -> memref<!tpu.dma_semaphore, #tpu.memory_space<semaphore_mem>>
    tpu.wait_dma2 semaphore(%129 : memref<!tpu.dma_semaphore, #tpu.memory_space<semaphore_mem>>) src(%125 : memref<128xf32, #tpu.memory_space<any>>) dst(%127 : memref<128xf32, #tpu.memory_space<vmem>>)
    %c0_i32_79 = arith.constant 0 : i32
    %c3_i32_80 = arith.constant 3 : i32
    %c3_i32_81 = arith.constant 3 : i32
    %c0_i32_82 = arith.constant 0 : i32
    %130 = tpu.memref_slice %arg2[%arg0, %21, %c0_i32_82] : memref<3x64x128xf32, #tpu.memory_space<any>> -> memref<1x1x128xf32, #tpu.memory_space<any>>
    %131 = tpu.memref_squeeze %130 : memref<1x1x128xf32, #tpu.memory_space<any>> -> memref<128xf32, #tpu.memory_space<any>>
    %c0_i32_83 = arith.constant 0 : i32
    %132 = tpu.memref_slice %arg3[%c0_i32_79, %c3_i32_80, %c0_i32_83] : memref<1x16x128xf32, #tpu.memory_space<vmem>> -> memref<1x1x128xf32, #tpu.memory_space<vmem>>
    %133 = tpu.memref_squeeze %132 : memref<1x1x128xf32, #tpu.memory_space<vmem>> -> memref<128xf32, #tpu.memory_space<vmem>>
    %134 = tpu.memref_slice %arg4[%c3_i32_81] : memref<16x!tpu.dma_semaphore, #tpu.memory_space<semaphore_mem>> -> memref<1x!tpu.dma_semaphore, #tpu.memory_space<semaphore_mem>>
    %135 = tpu.memref_squeeze %134 : memref<1x!tpu.dma_semaphore, #tpu.memory_space<semaphore_mem>> -> memref<!tpu.dma_semaphore, #tpu.memory_space<semaphore_mem>>
    tpu.wait_dma2 semaphore(%135 : memref<!tpu.dma_semaphore, #tpu.memory_space<semaphore_mem>>) src(%131 : memref<128xf32, #tpu.memory_space<any>>) dst(%133 : memref<128xf32, #tpu.memory_space<vmem>>)
    %c0_i32_84 = arith.constant 0 : i32
    %c4_i32_85 = arith.constant 4 : i32
    %c4_i32_86 = arith.constant 4 : i32
    %c0_i32_87 = arith.constant 0 : i32
    %136 = tpu.memref_slice %arg2[%arg0, %28, %c0_i32_87] : memref<3x64x128xf32, #tpu.memory_space<any>> -> memref<1x1x128xf32, #tpu.memory_space<any>>
    %137 = tpu.memref_squeeze %136 : memref<1x1x128xf32, #tpu.memory_space<any>> -> memref<128xf32, #tpu.memory_space<any>>
    %c0_i32_88 = arith.constant 0 : i32
    %138 = tpu.memref_slice %arg3[%c0_i32_84, %c4_i32_85, %c0_i32_88] : memref<1x16x128xf32, #tpu.memory_space<vmem>> -> memref<1x1x128xf32, #tpu.memory_space<vmem>>
    %139 = tpu.memref_squeeze %138 : memref<1x1x128xf32, #tpu.memory_space<vmem>> -> memref<128xf32, #tpu.memory_space<vmem>>
    %140 = tpu.memref_slice %arg4[%c4_i32_86] : memref<16x!tpu.dma_semaphore, #tpu.memory_space<semaphore_mem>> -> memref<1x!tpu.dma_semaphore, #tpu.memory_space<semaphore_mem>>
    %141 = tpu.memref_squeeze %140 : memref<1x!tpu.dma_semaphore, #tpu.memory_space<semaphore_mem>> -> memref<!tpu.dma_semaphore, #tpu.memory_space<semaphore_mem>>
    tpu.wait_dma2 semaphore(%141 : memref<!tpu.dma_semaphore, #tpu.memory_space<semaphore_mem>>) src(%137 : memref<128xf32, #tpu.memory_space<any>>) dst(%139 : memref<128xf32, #tpu.memory_space<vmem>>)
    %c0_i32_89 = arith.constant 0 : i32
    %c5_i32_90 = arith.constant 5 : i32
    %c5_i32_91 = arith.constant 5 : i32
    %c0_i32_92 = arith.constant 0 : i32
    %142 = tpu.memref_slice %arg2[%arg0, %35, %c0_i32_92] : memref<3x64x128xf32, #tpu.memory_space<any>> -> memref<1x1x128xf32, #tpu.memory_space<any>>
    %143 = tpu.memref_squeeze %142 : memref<1x1x128xf32, #tpu.memory_space<any>> -> memref<128xf32, #tpu.memory_space<any>>
    %c0_i32_93 = arith.constant 0 : i32
    %144 = tpu.memref_slice %arg3[%c0_i32_89, %c5_i32_90, %c0_i32_93] : memref<1x16x128xf32, #tpu.memory_space<vmem>> -> memref<1x1x128xf32, #tpu.memory_space<vmem>>
    %145 = tpu.memref_squeeze %144 : memref<1x1x128xf32, #tpu.memory_space<vmem>> -> memref<128xf32, #tpu.memory_space<vmem>>
    %146 = tpu.memref_slice %arg4[%c5_i32_91] : memref<16x!tpu.dma_semaphore, #tpu.memory_space<semaphore_mem>> -> memref<1x!tpu.dma_semaphore, #tpu.memory_space<semaphore_mem>>
    %147 = tpu.memref_squeeze %146 : memref<1x!tpu.dma_semaphore, #tpu.memory_space<semaphore_mem>> -> memref<!tpu.dma_semaphore, #tpu.memory_space<semaphore_mem>>
    tpu.wait_dma2 semaphore(%147 : memref<!tpu.dma_semaphore, #tpu.memory_space<semaphore_mem>>) src(%143 : memref<128xf32, #tpu.memory_space<any>>) dst(%145 : memref<128xf32, #tpu.memory_space<vmem>>)
    %c0_i32_94 = arith.constant 0 : i32
    %c6_i32_95 = arith.constant 6 : i32
    %c6_i32_96 = arith.constant 6 : i32
    %c0_i32_97 = arith.constant 0 : i32
    %148 = tpu.memref_slice %arg2[%arg0, %42, %c0_i32_97] : memref<3x64x128xf32, #tpu.memory_space<any>> -> memref<1x1x128xf32, #tpu.memory_space<any>>
    %149 = tpu.memref_squeeze %148 : memref<1x1x128xf32, #tpu.memory_space<any>> -> memref<128xf32, #tpu.memory_space<any>>
    %c0_i32_98 = arith.constant 0 : i32
    %150 = tpu.memref_slice %arg3[%c0_i32_94, %c6_i32_95, %c0_i32_98] : memref<1x16x128xf32, #tpu.memory_space<vmem>> -> memref<1x1x128xf32, #tpu.memory_space<vmem>>
    %151 = tpu.memref_squeeze %150 : memref<1x1x128xf32, #tpu.memory_space<vmem>> -> memref<128xf32, #tpu.memory_space<vmem>>
    %152 = tpu.memref_slice %arg4[%c6_i32_96] : memref<16x!tpu.dma_semaphore, #tpu.memory_space<semaphore_mem>> -> memref<1x!tpu.dma_semaphore, #tpu.memory_space<semaphore_mem>>
    %153 = tpu.memref_squeeze %152 : memref<1x!tpu.dma_semaphore, #tpu.memory_space<semaphore_mem>> -> memref<!tpu.dma_semaphore, #tpu.memory_space<semaphore_mem>>
    tpu.wait_dma2 semaphore(%153 : memref<!tpu.dma_semaphore, #tpu.memory_space<semaphore_mem>>) src(%149 : memref<128xf32, #tpu.memory_space<any>>) dst(%151 : memref<128xf32, #tpu.memory_space<vmem>>)
    %c0_i32_99 = arith.constant 0 : i32
    %c7_i32_100 = arith.constant 7 : i32
    %c7_i32_101 = arith.constant 7 : i32
    %c0_i32_102 = arith.constant 0 : i32
    %154 = tpu.memref_slice %arg2[%arg0, %49, %c0_i32_102] : memref<3x64x128xf32, #tpu.memory_space<any>> -> memref<1x1x128xf32, #tpu.memory_space<any>>
    %155 = tpu.memref_squeeze %154 : memref<1x1x128xf32, #tpu.memory_space<any>> -> memref<128xf32, #tpu.memory_space<any>>
    %c0_i32_103 = arith.constant 0 : i32
    %156 = tpu.memref_slice %arg3[%c0_i32_99, %c7_i32_100, %c0_i32_103] : memref<1x16x128xf32, #tpu.memory_space<vmem>> -> memref<1x1x128xf32, #tpu.memory_space<vmem>>
    %157 = tpu.memref_squeeze %156 : memref<1x1x128xf32, #tpu.memory_space<vmem>> -> memref<128xf32, #tpu.memory_space<vmem>>
    %158 = tpu.memref_slice %arg4[%c7_i32_101] : memref<16x!tpu.dma_semaphore, #tpu.memory_space<semaphore_mem>> -> memref<1x!tpu.dma_semaphore, #tpu.memory_space<semaphore_mem>>
    %159 = tpu.memref_squeeze %158 : memref<1x!tpu.dma_semaphore, #tpu.memory_space<semaphore_mem>> -> memref<!tpu.dma_semaphore, #tpu.memory_space<semaphore_mem>>
    tpu.wait_dma2 semaphore(%159 : memref<!tpu.dma_semaphore, #tpu.memory_space<semaphore_mem>>) src(%155 : memref<128xf32, #tpu.memory_space<any>>) dst(%157 : memref<128xf32, #tpu.memory_space<vmem>>)
    %c0_i32_104 = arith.constant 0 : i32
    %c8_i32_105 = arith.constant 8 : i32
    %c8_i32_106 = arith.constant 8 : i32
    %c0_i32_107 = arith.constant 0 : i32
    %160 = tpu.memref_slice %arg2[%arg0, %56, %c0_i32_107] : memref<3x64x128xf32, #tpu.memory_space<any>> -> memref<1x1x128xf32, #tpu.memory_space<any>>
    %161 = tpu.memref_squeeze %160 : memref<1x1x128xf32, #tpu.memory_space<any>> -> memref<128xf32, #tpu.memory_space<any>>
    %c0_i32_108 = arith.constant 0 : i32
    %162 = tpu.memref_slice %arg3[%c0_i32_104, %c8_i32_105, %c0_i32_108] : memref<1x16x128xf32, #tpu.memory_space<vmem>> -> memref<1x1x128xf32, #tpu.memory_space<vmem>>
    %163 = tpu.memref_squeeze %162 : memref<1x1x128xf32, #tpu.memory_space<vmem>> -> memref<128xf32, #tpu.memory_space<vmem>>
    %164 = tpu.memref_slice %arg4[%c8_i32_106] : memref<16x!tpu.dma_semaphore, #tpu.memory_space<semaphore_mem>> -> memref<1x!tpu.dma_semaphore, #tpu.memory_space<semaphore_mem>>
    %165 = tpu.memref_squeeze %164 : memref<1x!tpu.dma_semaphore, #tpu.memory_space<semaphore_mem>> -> memref<!tpu.dma_semaphore, #tpu.memory_space<semaphore_mem>>
    tpu.wait_dma2 semaphore(%165 : memref<!tpu.dma_semaphore, #tpu.memory_space<semaphore_mem>>) src(%161 : memref<128xf32, #tpu.memory_space<any>>) dst(%163 : memref<128xf32, #tpu.memory_space<vmem>>)
    %c0_i32_109 = arith.constant 0 : i32
    %c9_i32_110 = arith.constant 9 : i32
    %c9_i32_111 = arith.constant 9 : i32
    %c0_i32_112 = arith.constant 0 : i32
    %166 = tpu.memref_slice %arg2[%arg0, %63, %c0_i32_112] : memref<3x64x128xf32, #tpu.memory_space<any>> -> memref<1x1x128xf32, #tpu.memory_space<any>>
    %167 = tpu.memref_squeeze %166 : memref<1x1x128xf32, #tpu.memory_space<any>> -> memref<128xf32, #tpu.memory_space<any>>
    %c0_i32_113 = arith.constant 0 : i32
    %168 = tpu.memref_slice %arg3[%c0_i32_109, %c9_i32_110, %c0_i32_113] : memref<1x16x128xf32, #tpu.memory_space<vmem>> -> memref<1x1x128xf32, #tpu.memory_space<vmem>>
    %169 = tpu.memref_squeeze %168 : memref<1x1x128xf32, #tpu.memory_space<vmem>> -> memref<128xf32, #tpu.memory_space<vmem>>
    %170 = tpu.memref_slice %arg4[%c9_i32_111] : memref<16x!tpu.dma_semaphore, #tpu.memory_space<semaphore_mem>> -> memref<1x!tpu.dma_semaphore, #tpu.memory_space<semaphore_mem>>
    %171 = tpu.memref_squeeze %170 : memref<1x!tpu.dma_semaphore, #tpu.memory_space<semaphore_mem>> -> memref<!tpu.dma_semaphore, #tpu.memory_space<semaphore_mem>>
    tpu.wait_dma2 semaphore(%171 : memref<!tpu.dma_semaphore, #tpu.memory_space<semaphore_mem>>) src(%167 : memref<128xf32, #tpu.memory_space<any>>) dst(%169 : memref<128xf32, #tpu.memory_space<vmem>>)
    %c0_i32_114 = arith.constant 0 : i32
    %c10_i32_115 = arith.constant 10 : i32
    %c10_i32_116 = arith.constant 10 : i32
    %c0_i32_117 = arith.constant 0 : i32
    %172 = tpu.memref_slice %arg2[%arg0, %70, %c0_i32_117] : memref<3x64x128xf32, #tpu.memory_space<any>> -> memref<1x1x128xf32, #tpu.memory_space<any>>
    %173 = tpu.memref_squeeze %172 : memref<1x1x128xf32, #tpu.memory_space<any>> -> memref<128xf32, #tpu.memory_space<any>>
    %c0_i32_118 = arith.constant 0 : i32
    %174 = tpu.memref_slice %arg3[%c0_i32_114, %c10_i32_115, %c0_i32_118] : memref<1x16x128xf32, #tpu.memory_space<vmem>> -> memref<1x1x128xf32, #tpu.memory_space<vmem>>
    %175 = tpu.memref_squeeze %174 : memref<1x1x128xf32, #tpu.memory_space<vmem>> -> memref<128xf32, #tpu.memory_space<vmem>>
    %176 = tpu.memref_slice %arg4[%c10_i32_116] : memref<16x!tpu.dma_semaphore, #tpu.memory_space<semaphore_mem>> -> memref<1x!tpu.dma_semaphore, #tpu.memory_space<semaphore_mem>>
    %177 = tpu.memref_squeeze %176 : memref<1x!tpu.dma_semaphore, #tpu.memory_space<semaphore_mem>> -> memref<!tpu.dma_semaphore, #tpu.memory_space<semaphore_mem>>
    tpu.wait_dma2 semaphore(%177 : memref<!tpu.dma_semaphore, #tpu.memory_space<semaphore_mem>>) src(%173 : memref<128xf32, #tpu.memory_space<any>>) dst(%175 : memref<128xf32, #tpu.memory_space<vmem>>)
    %c0_i32_119 = arith.constant 0 : i32
    %c11_i32_120 = arith.constant 11 : i32
    %c11_i32_121 = arith.constant 11 : i32
    %c0_i32_122 = arith.constant 0 : i32
    %178 = tpu.memref_slice %arg2[%arg0, %77, %c0_i32_122] : memref<3x64x128xf32, #tpu.memory_space<any>> -> memref<1x1x128xf32, #tpu.memory_space<any>>
    %179 = tpu.memref_squeeze %178 : memref<1x1x128xf32, #tpu.memory_space<any>> -> memref<128xf32, #tpu.memory_space<any>>
    %c0_i32_123 = arith.constant 0 : i32
    %180 = tpu.memref_slice %arg3[%c0_i32_119, %c11_i32_120, %c0_i32_123] : memref<1x16x128xf32, #tpu.memory_space<vmem>> -> memref<1x1x128xf32, #tpu.memory_space<vmem>>
    %181 = tpu.memref_squeeze %180 : memref<1x1x128xf32, #tpu.memory_space<vmem>> -> memref<128xf32, #tpu.memory_space<vmem>>
    %182 = tpu.memref_slice %arg4[%c11_i32_121] : memref<16x!tpu.dma_semaphore, #tpu.memory_space<semaphore_mem>> -> memref<1x!tpu.dma_semaphore, #tpu.memory_space<semaphore_mem>>
    %183 = tpu.memref_squeeze %182 : memref<1x!tpu.dma_semaphore, #tpu.memory_space<semaphore_mem>> -> memref<!tpu.dma_semaphore, #tpu.memory_space<semaphore_mem>>
    tpu.wait_dma2 semaphore(%183 : memref<!tpu.dma_semaphore, #tpu.memory_space<semaphore_mem>>) src(%179 : memref<128xf32, #tpu.memory_space<any>>) dst(%181 : memref<128xf32, #tpu.memory_space<vmem>>)
    %c0_i32_124 = arith.constant 0 : i32
    %c12_i32_125 = arith.constant 12 : i32
    %c12_i32_126 = arith.constant 12 : i32
    %c0_i32_127 = arith.constant 0 : i32
    %184 = tpu.memref_slice %arg2[%arg0, %84, %c0_i32_127] : memref<3x64x128xf32, #tpu.memory_space<any>> -> memref<1x1x128xf32, #tpu.memory_space<any>>
    %185 = tpu.memref_squeeze %184 : memref<1x1x128xf32, #tpu.memory_space<any>> -> memref<128xf32, #tpu.memory_space<any>>
    %c0_i32_128 = arith.constant 0 : i32
    %186 = tpu.memref_slice %arg3[%c0_i32_124, %c12_i32_125, %c0_i32_128] : memref<1x16x128xf32, #tpu.memory_space<vmem>> -> memref<1x1x128xf32, #tpu.memory_space<vmem>>
    %187 = tpu.memref_squeeze %186 : memref<1x1x128xf32, #tpu.memory_space<vmem>> -> memref<128xf32, #tpu.memory_space<vmem>>
    %188 = tpu.memref_slice %arg4[%c12_i32_126] : memref<16x!tpu.dma_semaphore, #tpu.memory_space<semaphore_mem>> -> memref<1x!tpu.dma_semaphore, #tpu.memory_space<semaphore_mem>>
    %189 = tpu.memref_squeeze %188 : memref<1x!tpu.dma_semaphore, #tpu.memory_space<semaphore_mem>> -> memref<!tpu.dma_semaphore, #tpu.memory_space<semaphore_mem>>
    tpu.wait_dma2 semaphore(%189 : memref<!tpu.dma_semaphore, #tpu.memory_space<semaphore_mem>>) src(%185 : memref<128xf32, #tpu.memory_space<any>>) dst(%187 : memref<128xf32, #tpu.memory_space<vmem>>)
    %c0_i32_129 = arith.constant 0 : i32
    %c13_i32_130 = arith.constant 13 : i32
    %c13_i32_131 = arith.constant 13 : i32
    %c0_i32_132 = arith.constant 0 : i32
    %190 = tpu.memref_slice %arg2[%arg0, %91, %c0_i32_132] : memref<3x64x128xf32, #tpu.memory_space<any>> -> memref<1x1x128xf32, #tpu.memory_space<any>>
    %191 = tpu.memref_squeeze %190 : memref<1x1x128xf32, #tpu.memory_space<any>> -> memref<128xf32, #tpu.memory_space<any>>
    %c0_i32_133 = arith.constant 0 : i32
    %192 = tpu.memref_slice %arg3[%c0_i32_129, %c13_i32_130, %c0_i32_133] : memref<1x16x128xf32, #tpu.memory_space<vmem>> -> memref<1x1x128xf32, #tpu.memory_space<vmem>>
    %193 = tpu.memref_squeeze %192 : memref<1x1x128xf32, #tpu.memory_space<vmem>> -> memref<128xf32, #tpu.memory_space<vmem>>
    %194 = tpu.memref_slice %arg4[%c13_i32_131] : memref<16x!tpu.dma_semaphore, #tpu.memory_space<semaphore_mem>> -> memref<1x!tpu.dma_semaphore, #tpu.memory_space<semaphore_mem>>
    %195 = tpu.memref_squeeze %194 : memref<1x!tpu.dma_semaphore, #tpu.memory_space<semaphore_mem>> -> memref<!tpu.dma_semaphore, #tpu.memory_space<semaphore_mem>>
    tpu.wait_dma2 semaphore(%195 : memref<!tpu.dma_semaphore, #tpu.memory_space<semaphore_mem>>) src(%191 : memref<128xf32, #tpu.memory_space<any>>) dst(%193 : memref<128xf32, #tpu.memory_space<vmem>>)
    %c0_i32_134 = arith.constant 0 : i32
    %c14_i32_135 = arith.constant 14 : i32
    %c14_i32_136 = arith.constant 14 : i32
    %c0_i32_137 = arith.constant 0 : i32
    %196 = tpu.memref_slice %arg2[%arg0, %98, %c0_i32_137] : memref<3x64x128xf32, #tpu.memory_space<any>> -> memref<1x1x128xf32, #tpu.memory_space<any>>
    %197 = tpu.memref_squeeze %196 : memref<1x1x128xf32, #tpu.memory_space<any>> -> memref<128xf32, #tpu.memory_space<any>>
    %c0_i32_138 = arith.constant 0 : i32
    %198 = tpu.memref_slice %arg3[%c0_i32_134, %c14_i32_135, %c0_i32_138] : memref<1x16x128xf32, #tpu.memory_space<vmem>> -> memref<1x1x128xf32, #tpu.memory_space<vmem>>
    %199 = tpu.memref_squeeze %198 : memref<1x1x128xf32, #tpu.memory_space<vmem>> -> memref<128xf32, #tpu.memory_space<vmem>>
    %200 = tpu.memref_slice %arg4[%c14_i32_136] : memref<16x!tpu.dma_semaphore, #tpu.memory_space<semaphore_mem>> -> memref<1x!tpu.dma_semaphore, #tpu.memory_space<semaphore_mem>>
    %201 = tpu.memref_squeeze %200 : memref<1x!tpu.dma_semaphore, #tpu.memory_space<semaphore_mem>> -> memref<!tpu.dma_semaphore, #tpu.memory_space<semaphore_mem>>
    tpu.wait_dma2 semaphore(%201 : memref<!tpu.dma_semaphore, #tpu.memory_space<semaphore_mem>>) src(%197 : memref<128xf32, #tpu.memory_space<any>>) dst(%199 : memref<128xf32, #tpu.memory_space<vmem>>)
    %c0_i32_139 = arith.constant 0 : i32
    %c15_i32_140 = arith.constant 15 : i32
    %c15_i32_141 = arith.constant 15 : i32
    %c0_i32_142 = arith.constant 0 : i32
    %202 = tpu.memref_slice %arg2[%arg0, %105, %c0_i32_142] : memref<3x64x128xf32, #tpu.memory_space<any>> -> memref<1x1x128xf32, #tpu.memory_space<any>>
    %203 = tpu.memref_squeeze %202 : memref<1x1x128xf32, #tpu.memory_space<any>> -> memref<128xf32, #tpu.memory_space<any>>
    %c0_i32_143 = arith.constant 0 : i32
    %204 = tpu.memref_slice %arg3[%c0_i32_139, %c15_i32_140, %c0_i32_143] : memref<1x16x128xf32, #tpu.memory_space<vmem>> -> memref<1x1x128xf32, #tpu.memory_space<vmem>>
    %205 = tpu.memref_squeeze %204 : memref<1x1x128xf32, #tpu.memory_space<vmem>> -> memref<128xf32, #tpu.memory_space<vmem>>
    %206 = tpu.memref_slice %arg4[%c15_i32_141] : memref<16x!tpu.dma_semaphore, #tpu.memory_space<semaphore_mem>> -> memref<1x!tpu.dma_semaphore, #tpu.memory_space<semaphore_mem>>
    %207 = tpu.memref_squeeze %206 : memref<1x!tpu.dma_semaphore, #tpu.memory_space<semaphore_mem>> -> memref<!tpu.dma_semaphore, #tpu.memory_space<semaphore_mem>>
    tpu.wait_dma2 semaphore(%207 : memref<!tpu.dma_semaphore, #tpu.memory_space<semaphore_mem>>) src(%203 : memref<128xf32, #tpu.memory_space<any>>) dst(%205 : memref<128xf32, #tpu.memory_space<vmem>>)
    return
  }
  func.func @transform_1(%arg0: i32, %arg1: memref<16xi32, #tpu.memory_space<smem>>) -> (i32, i32, i32) {
    %c0_i32 = arith.constant 0 : i32
    %c0_i32_0 = arith.constant 0 : i32
    %c0_i32_1 = arith.constant 0 : i32
    return %arg0, %c0_i32, %c0_i32_0 : i32, i32, i32
  }
}

</mosaic_0001>

<llo_original>
// kernel: ensemble_tgt_emb.1
$region0: #{ensemble_tgt_emb.1}
  #allocation0 [shape = 'u32[]', space=smem, size = 0x4, offset = 0x4, fixed_abs, tag = 'smem constant byte address 0x4 - core index']
  #allocation1 [shape = 'u32[144,128]{1,0:T(1,128)}', space=vmem, size = 0x12000, scoped, tag = 'internal scratch']
  #allocation2 [shape = 's32[16]{0}', space=sflag, size = 0x40, scoped, tag = 'scratch operand']
  #allocation3 [shape = 's32[1]{0}', space=sflag, size = 0x4, scoped, tag = 'scoped memory for ensemble_tgt_emb.1']
  #allocation4 [shape = 'u8[512]{0}', space=smem, size = 0x200, scoped, tag = 'prefetched SMEM operand 0']
  #allocation5 [shape = 's32[]', space=sflag, size = 0x4, offset = 0, fixed_abs, tag = 'sflag constant byte address 0x0 - dummy sync flag']
  #allocation6 [shape = 's32[]', space=sflag, size = 0x4, offset = 0, fixed_abs, tag = 'sflag constant byte address 0x0 - dummy sync flag']
  #allocation7 [shape = 'u32[]', space=smem, size = 0x4, offset = 0x44, fixed_abs, tag = 'smem constant byte address 0x44 - assertion arg 0']
  #allocation8 [shape = 'u32[]', space=smem, size = 0x4, offset = 0x48, fixed_abs, tag = 'smem constant byte address 0x48 - assertion arg 1']
  #allocation9 [shape = 's32[]', space=sflag, size = 0x4, offset = 0, fixed_abs, tag = 'sflag constant byte address 0x0 - dummy sync flag']
  #allocation10 [shape = 's32[]', space=sflag, size = 0x4, offset = 0, fixed_abs, tag = 'sflag constant byte address 0x0 - dummy sync flag']
  #allocation11 [shape = 's32[]', space=sflag, size = 0x4, offset = 0, fixed_abs, tag = 'sflag constant byte address 0x0 - dummy sync flag']
  #allocation12 [shape = 's32[]', space=sflag, size = 0x4, offset = 0, fixed_abs, tag = 'sflag constant byte address 0x0 - dummy sync flag']
  #allocation13 [shape = 's32[]', space=sflag, size = 0x4, offset = 0, fixed_abs, tag = 'sflag constant byte address 0x0 - dummy sync flag']
  #allocation14 [shape = 's32[]', space=sflag, size = 0x4, offset = 0, fixed_abs, tag = 'sflag constant byte address 0x0 - dummy sync flag']
  #allocation15 [shape = 's32[]', space=sflag, size = 0x4, offset = 0, fixed_abs, tag = 'sflag constant byte address 0x0 - dummy sync flag']
  #allocation16 [shape = 's32[]', space=sflag, size = 0x4, offset = 0, fixed_abs, tag = 'sflag constant byte address 0x0 - dummy sync flag']
  #allocation17 [shape = 's32[]', space=sflag, size = 0x4, offset = 0, fixed_abs, tag = 'sflag constant byte address 0x0 - dummy sync flag']
  #allocation18 [shape = 's32[]', space=sflag, size = 0x4, offset = 0, fixed_abs, tag = 'sflag constant byte address 0x0 - dummy sync flag']
  #allocation19 [shape = 's32[]', space=sflag, size = 0x4, offset = 0, fixed_abs, tag = 'sflag constant byte address 0x0 - dummy sync flag']
  #allocation20 [shape = 's32[]', space=sflag, size = 0x4, offset = 0, fixed_abs, tag = 'sflag constant byte address 0x0 - dummy sync flag']
  #allocation21 [shape = 's32[]', space=sflag, size = 0x4, offset = 0, fixed_abs, tag = 'sflag constant byte address 0x0 - dummy sync flag']
  #allocation22 [shape = 's32[]', space=sflag, size = 0x4, offset = 0, fixed_abs, tag = 'sflag constant byte address 0x0 - dummy sync flag']
  #allocation23 [shape = 's32[]', space=sflag, size = 0x4, offset = 0, fixed_abs, tag = 'sflag constant byte address 0x0 - dummy sync flag']
  #allocation24 [shape = 's32[]', space=sflag, size = 0x4, offset = 0, fixed_abs, tag = 'sflag constant byte address 0x0 - dummy sync flag']
  #allocation25 [shape = 's32[]', space=sflag, size = 0x4, offset = 0, fixed_abs, tag = 'sflag constant byte address 0x0 - dummy sync flag']
  #allocation26 [shape = 's32[]', space=sflag, size = 0x4, offset = 0, fixed_abs, tag = 'sflag constant byte address 0x0 - dummy sync flag']
  #allocation27 [shape = 's32[]', space=sflag, size = 0x4, offset = 0, fixed_abs, tag = 'sflag constant byte address 0x0 - dummy sync flag']
  #allocation28 [shape = 's32[]', space=sflag, size = 0x4, offset = 0, fixed_abs, tag = 'sflag constant byte address 0x0 - dummy sync flag']
  #allocation29 [shape = 's32[]', space=sflag, size = 0x4, offset = 0, fixed_abs, tag = 'sflag constant byte address 0x0 - dummy sync flag']
  #allocation30 [shape = 's32[]', space=sflag, size = 0x4, offset = 0, fixed_abs, tag = 'sflag constant byte address 0x0 - dummy sync flag']
  #allocation31 [shape = 's32[]', space=sflag, size = 0x4, offset = 0, fixed_abs, tag = 'sflag constant byte address 0x0 - dummy sync flag']
  #allocation32 [shape = 's32[]', space=sflag, size = 0x4, offset = 0, fixed_abs, tag = 'sflag constant byte address 0x0 - dummy sync flag']
  #allocation33 [shape = 's32[]', space=sflag, size = 0x4, offset = 0, fixed_abs, tag = 'sflag constant byte address 0x0 - dummy sync flag']
  #allocation34 [shape = 's32[]', space=sflag, size = 0x4, offset = 0, fixed_abs, tag = 'sflag constant byte address 0x0 - dummy sync flag']
  #allocation35 [shape = 's32[]', space=sflag, size = 0x4, offset = 0, fixed_abs, tag = 'sflag constant byte address 0x0 - dummy sync flag']
  #allocation36 [shape = 's32[]', space=sflag, size = 0x4, offset = 0, fixed_abs, tag = 'sflag constant byte address 0x0 - dummy sync flag']
  #allocation37 [shape = 's32[]', space=sflag, size = 0x4, offset = 0, fixed_abs, tag = 'sflag constant byte address 0x0 - dummy sync flag']
  #allocation38 [shape = 's32[]', space=sflag, size = 0x4, offset = 0, fixed_abs, tag = 'sflag constant byte address 0x0 - dummy sync flag']
  %s0 = inlined_call_operand.vmem [shape: s32[16], index: 0, kind: input, shape index: {}]
  %s1 = inlined_call_operand.hbm [shape: f32[3,64,128], index: 1, kind: input, shape index: {}]
  %s2 = inlined_call_operand.vmem [shape: f32[3,16,128], index: 2, kind: output, shape index: {}]
  %s3 = sld [smem:[#allocation0]]
  $region89: #{ensemble_tgt_emb.1} parent=0
    _
  %s5 = ssub.s32 1, %s3
  %s6 = scalar_select 0, %s5, %s3
  %s7 = sshll.u32 %s0, 4
  %s8 = int_to_ptr.vmem [resolvable:$true] %s7
  %10 = dma.vmem_to_smem %s8, 16, [#allocation4], [#allocation3]
  %11 = dma.done [#allocation3], 16
  %12 = sfence
  loop: start=0, step=1, limit=4
  $region2: #{ensemble_tgt_emb.1} parent=0 // loop_pre_header
    _
  $region3: #{ensemble_tgt_emb.1} parent=0 // loop_header
    %s14 = sphi 0, %s18
    %p15 = scmp.ge.s32.totalorder %s14, 4
    %s23 = sphi 0, %s25
    %s26 = sphi 0, %s23
    %s36 = sphi 0, %s26
  $region4: #{ensemble_tgt_emb.1} parent=0 // loop_header_branch
    %17 = sbr.rel (%p15) target = $region8
  $region5: #{ensemble_tgt_emb.1} parent=0 // loop_body
    %s19 = ssub.s32 %s14, 1
    %s20 = sadd.s32 %s14, 1
    %s21 = ssub.s32 %s14, %s20
    %p22 = scmp.eq.s32.totalorder %s21, 0
    %s24 = sadd.s32 %s23, 1
    %s25 = scalar_select %p22, %s23, %s24
    %p27 = pneg %p22
    %p28 = scmp.eq.s32.totalorder %s14, 2
    %p29 = por %p27, %p28
    %p30 = scmp.ne.s32.totalorder %s23, %s26
    %p31 = scmp.eq.s32.totalorder %s14, 0
    %p32 = por %p30, %p31
    %p33 = scmp.ne.s32.totalorder %s23, %s26
    %p34 = scmp.eq.s32.totalorder %s19, 2
    %p35 = por %p33, %p34
    %p37 = scmp.ne.s32.totalorder %s26, %s36
    %p38 = scmp.eq.s32.totalorder %s19, 0
    %p39 = por %p37, %p38
    %p40 = scmp.lt.s32.totalorder %s14, 3
    // Predicated region
    $region9: #{ensemble_tgt_emb.1} parent=5 // pred_check
      %p41 = pneg %p40
    $region10: #{ensemble_tgt_emb.1} parent=5 // pred_check_branch
      %43 = sbr.rel (%p41) target = $region12
    $region11: #{ensemble_tgt_emb.1} parent=5 // pred_region
      %p44 = pneg %p32
      %p45 = pneg %p29
      %p46 = scmp.lt.s32.totalorder %s14, 2
      %s47 = scalar_select %p46, %s14, 2
      %s48 = smul.addr %s47, 2
      %s49 = smul.addr %s48, 8
      %s50 = scalar_lea.vmem %s2, %s49
      %p51 = scmp.lt.s32.totalorder %s14, 2
      %s52 = scalar_select %p51, %s14, 2
      %s53 = smul.addr %s52, 2
      %s54 = smul.addr %s53, 8
      %s55 = scalar_lea.vmem %s2, %s54
      %s56 = sld [smem:[#allocation4]]
      %s57 = smul.u32 %s14, 64
      %s58 = sadd.s32 %s56, %s57
      %s59 = smul.addr %s58, 16
      %s60 = scalar_lea.hbm %s1, %s59
      // Predicated region
      $region13: #{ensemble_tgt_emb.1} parent=11 // pred_check
        _
      $region14: #{ensemble_tgt_emb.1} parent=11 // pred_check_branch
        %62 = sbr.rel target = $region16
      $region15: #{ensemble_tgt_emb.1} parent=11 // pred_region
        %63 = sst [smem:[#allocation7]] [#allocation6]
        %64 = sst [smem:[#allocation8]] [#allocation5]
      $region16: #{ensemble_tgt_emb.1} parent=11 // pred_fallthru
        _
      %66 = shalt.err (0)
      %s68 = sshll.u32 %s55, 4
      %s69 = int_to_ptr.vmem [resolvable:$true] %s68
      %71 = dma.hbm_to_vmem [thread:$0]  %s60, 16, %s69, [#allocation2]
      %s72 = sld [smem:[#allocation4 + $0x1]]
      %s73 = sadd.s32 %s72, %s57
      %s74 = smul.addr %s73, 16
      %s75 = scalar_lea.hbm %s1, %s74
      %s76 = scalar_lea.vmem %s55, 1
      %s77 = scalar_lea.sflag [#allocation2], 1
      // Predicated region
      $region17: #{ensemble_tgt_emb.1} parent=11 // pred_check
        _
      $region18: #{ensemble_tgt_emb.1} parent=11 // pred_check_branch
        %79 = sbr.rel target = $region20
      $region19: #{ensemble_tgt_emb.1} parent=11 // pred_region
        %80 = sst [smem:[#allocation7]] [#allocation10]
        %81 = sst [smem:[#allocation8]] [#allocation9]
      $region20: #{ensemble_tgt_emb.1} parent=11 // pred_fallthru
        _
      %83 = shalt.err (0)
      %s85 = sshll.u32 %s76, 4
      %s86 = int_to_ptr.vmem [resolvable:$true] %s85
      %88 = dma.hbm_to_vmem [thread:$0]  %s75, 16, %s86, %s77
      %s89 = sld [smem:[#allocation4 + $0x2]]
      %s90 = sadd.s32 %s89, %s57
      %s91 = smul.addr %s90, 16
      %s92 = scalar_lea.hbm %s1, %s91
      %s93 = scalar_lea.vmem %s55, 2
      %s94 = scalar_lea.sflag [#allocation2], 2
      // Predicated region
      $region21: #{ensemble_tgt_emb.1} parent=11 // pred_check
        _
      $region22: #{ensemble_tgt_emb.1} parent=11 // pred_check_branch
        %96 = sbr.rel target = $region24
      $region23: #{ensemble_tgt_emb.1} parent=11 // pred_region
        %97 = sst [smem:[#allocation7]] [#allocation12]
        %98 = sst [smem:[#allocation8]] [#allocation11]
      $region24: #{ensemble_tgt_emb.1} parent=11 // pred_fallthru
        _
      %100 = shalt.err (0)
      %s102 = sshll.u32 %s93, 4
      %s103 = int_to_ptr.vmem [resolvable:$true] %s102
      %105 = dma.hbm_to_vmem [thread:$0]  %s92, 16, %s103, %s94
      %s106 = sld [smem:[#allocation4 + $0x3]]
      %s107 = sadd.s32 %s106, %s57
      %s108 = smul.addr %s107, 16
      %s109 = scalar_lea.hbm %s1, %s108
      %s110 = scalar_lea.vmem %s55, 3
      %s111 = scalar_lea.sflag [#allocation2], 3
      // Predicated region
      $region25: #{ensemble_tgt_emb.1} parent=11 // pred_check
        _
      $region26: #{ensemble_tgt_emb.1} parent=11 // pred_check_branch
        %113 = sbr.rel target = $region28
      $region27: #{ensemble_tgt_emb.1} parent=11 // pred_region
        %114 = sst [smem:[#allocation7]] [#allocation14]
        %115 = sst [smem:[#allocation8]] [#allocation13]
      $region28: #{ensemble_tgt_emb.1} parent=11 // pred_fallthru
        _
      %117 = shalt.err (0)
      %s119 = sshll.u32 %s110, 4
      %s120 = int_to_ptr.vmem [resolvable:$true] %s119
      %122 = dma.hbm_to_vmem [thread:$0]  %s109, 16, %s120, %s111
      %s123 = sld [smem:[#allocation4 + $0x4]]
      %s124 = sadd.s32 %s123, %s57
      %s125 = smul.addr %s124, 16
      %s126 = scalar_lea.hbm %s1, %s125
      %s127 = scalar_lea.vmem %s55, 4
      %s128 = scalar_lea.sflag [#allocation2], 4
      // Predicated region
      $region29: #{ensemble_tgt_emb.1} parent=11 // pred_check
        _
      $region30: #{ensemble_tgt_emb.1} parent=11 // pred_check_branch
        %130 = sbr.rel target = $region32
      $region31: #{ensemble_tgt_emb.1} parent=11 // pred_region
        %131 = sst [smem:[#allocation7]] [#allocation16]
        %132 = sst [smem:[#allocation8]] [#allocation15]
      $region32: #{ensemble_tgt_emb.1} parent=11 // pred_fallthru
        _
      %134 = shalt.err (0)
      %s136 = sshll.u32 %s127, 4
      %s137 = int_to_ptr.vmem [resolvable:$true] %s136
      %139 = dma.hbm_to_vmem [thread:$0]  %s126, 16, %s137, %s128
      %s140 = sld [smem:[#allocation4 + $0x5]]
      %s141 = sadd.s32 %s140, %s57
      %s142 = smul.addr %s141, 16
      %s143 = scalar_lea.hbm %s1, %s142
      %s144 = scalar_lea.vmem %s55, 5
      %s145 = scalar_lea.sflag [#allocation2], 5
      // Predicated region
      $region33: #{ensemble_tgt_emb.1} parent=11 // pred_check
        _
      $region34: #{ensemble_tgt_emb.1} parent=11 // pred_check_branch
        %147 = sbr.rel target = $region36
      $region35: #{ensemble_tgt_emb.1} parent=11 // pred_region
        %148 = sst [smem:[#allocation7]] [#allocation18]
        %149 = sst [smem:[#allocation8]] [#allocation17]
      $region36: #{ensemble_tgt_emb.1} parent=11 // pred_fallthru
        _
      %151 = shalt.err (0)
      %s153 = sshll.u32 %s144, 4
      %s154 = int_to_ptr.vmem [resolvable:$true] %s153
      %156 = dma.hbm_to_vmem [thread:$0]  %s143, 16, %s154, %s145
      %s157 = sld [smem:[#allocation4 + $0x6]]
      %s158 = sadd.s32 %s157, %s57
      %s159 = smul.addr %s158, 16
      %s160 = scalar_lea.hbm %s1, %s159
      %s161 = scalar_lea.vmem %s55, 6
      %s162 = scalar_lea.sflag [#allocation2], 6
      // Predicated region
      $region37: #{ensemble_tgt_emb.1} parent=11 // pred_check
        _
      $region38: #{ensemble_tgt_emb.1} parent=11 // pred_check_branch
        %164 = sbr.rel target = $region40
      $region39: #{ensemble_tgt_emb.1} parent=11 // pred_region
        %165 = sst [smem:[#allocation7]] [#allocation20]
        %166 = sst [smem:[#allocation8]] [#allocation19]
      $region40: #{ensemble_tgt_emb.1} parent=11 // pred_fallthru
        _
      %168 = shalt.err (0)
      %s170 = sshll.u32 %s161, 4
      %s171 = int_to_ptr.vmem [resolvable:$true] %s170
      %173 = dma.hbm_to_vmem [thread:$0]  %s160, 16, %s171, %s162
      %s174 = sld [smem:[#allocation4 + $0x7]]
      %s175 = sadd.s32 %s174, %s57
      %s176 = smul.addr %s175, 16
      %s177 = scalar_lea.hbm %s1, %s176
      %s178 = scalar_lea.vmem %s55, 7
      %s179 = scalar_lea.sflag [#allocation2], 7
      // Predicated region
      $region41: #{ensemble_tgt_emb.1} parent=11 // pred_check
        _
      $region42: #{ensemble_tgt_emb.1} parent=11 // pred_check_branch
        %181 = sbr.rel target = $region44
      $region43: #{ensemble_tgt_emb.1} parent=11 // pred_region
        %182 = sst [smem:[#allocation7]] [#allocation22]
        %183 = sst [smem:[#allocation8]] [#allocation21]
      $region44: #{ensemble_tgt_emb.1} parent=11 // pred_fallthru
        _
      %185 = shalt.err (0)
      %s187 = sshll.u32 %s178, 4
      %s188 = int_to_ptr.vmem [resolvable:$true] %s187
      %190 = dma.hbm_to_vmem [thread:$0]  %s177, 16, %s188, %s179
      %s191 = sld [smem:[#allocation4 + $0x8]]
      %s192 = sadd.s32 %s191, %s57
      %s193 = smul.addr %s192, 16
      %s194 = scalar_lea.hbm %s1, %s193
      %s195 = scalar_lea.vmem %s55, 8
      %s196 = scalar_lea.sflag [#allocation2], 8
      // Predicated region
      $region45: #{ensemble_tgt_emb.1} parent=11 // pred_check
        _
      $region46: #{ensemble_tgt_emb.1} parent=11 // pred_check_branch
        %198 = sbr.rel target = $region48
      $region47: #{ensemble_tgt_emb.1} parent=11 // pred_region
        %199 = sst [smem:[#allocation7]] [#allocation24]
        %200 = sst [smem:[#allocation8]] [#allocation23]
      $region48: #{ensemble_tgt_emb.1} parent=11 // pred_fallthru
        _
      %202 = shalt.err (0)
      %s204 = sshll.u32 %s195, 4
      %s205 = int_to_ptr.vmem [resolvable:$true] %s204
      %207 = dma.hbm_to_vmem [thread:$0]  %s194, 16, %s205, %s196
      %s208 = sld [smem:[#allocation4 + $0x9]]
      %s209 = sadd.s32 %s208, %s57
      %s210 = smul.addr %s209, 16
      %s211 = scalar_lea.hbm %s1, %s210
      %s212 = scalar_lea.vmem %s55, 9
      %s213 = scalar_lea.sflag [#allocation2], 9
      // Predicated region
      $region49: #{ensemble_tgt_emb.1} parent=11 // pred_check
        _
      $region50: #{ensemble_tgt_emb.1} parent=11 // pred_check_branch
        %215 = sbr.rel target = $region52
      $region51: #{ensemble_tgt_emb.1} parent=11 // pred_region
        %216 = sst [smem:[#allocation7]] [#allocation26]
        %217 = sst [smem:[#allocation8]] [#allocation25]
      $region52: #{ensemble_tgt_emb.1} parent=11 // pred_fallthru
        _
      %219 = shalt.err (0)
      %s221 = sshll.u32 %s212, 4
      %s222 = int_to_ptr.vmem [resolvable:$true] %s221
      %224 = dma.hbm_to_vmem [thread:$0]  %s211, 16, %s222, %s213
      %s225 = sld [smem:[#allocation4 + $0xa]]
      %s226 = sadd.s32 %s225, %s57
      %s227 = smul.addr %s226, 16
      %s228 = scalar_lea.hbm %s1, %s227
      %s229 = scalar_lea.vmem %s55, 10
      %s230 = scalar_lea.sflag [#allocation2], 10
      // Predicated region
      $region53: #{ensemble_tgt_emb.1} parent=11 // pred_check
        _
      $region54: #{ensemble_tgt_emb.1} parent=11 // pred_check_branch
        %232 = sbr.rel target = $region56
      $region55: #{ensemble_tgt_emb.1} parent=11 // pred_region
        %233 = sst [smem:[#allocation7]] [#allocation28]
        %234 = sst [smem:[#allocation8]] [#allocation27]
      $region56: #{ensemble_tgt_emb.1} parent=11 // pred_fallthru
        _
      %236 = shalt.err (0)
      %s238 = sshll.u32 %s229, 4
      %s239 = int_to_ptr.vmem [resolvable:$true] %s238
      %241 = dma.hbm_to_vmem [thread:$0]  %s228, 16, %s239, %s230
      %s242 = sld [smem:[#allocation4 + $0xb]]
      %s243 = sadd.s32 %s242, %s57
      %s244 = smul.addr %s243, 16
      %s245 = scalar_lea.hbm %s1, %s244
      %s246 = scalar_lea.vmem %s55, 11
      %s247 = scalar_lea.sflag [#allocation2], 11
      // Predicated region
      $region57: #{ensemble_tgt_emb.1} parent=11 // pred_check
        _
      $region58: #{ensemble_tgt_emb.1} parent=11 // pred_check_branch
        %249 = sbr.rel target = $region60
      $region59: #{ensemble_tgt_emb.1} parent=11 // pred_region
        %250 = sst [smem:[#allocation7]] [#allocation30]
        %251 = sst [smem:[#allocation8]] [#allocation29]
      $region60: #{ensemble_tgt_emb.1} parent=11 // pred_fallthru
        _
      %253 = shalt.err (0)
      %s255 = sshll.u32 %s246, 4
      %s256 = int_to_ptr.vmem [resolvable:$true] %s255
      %258 = dma.hbm_to_vmem [thread:$0]  %s245, 16, %s256, %s247
      %s259 = sld [smem:[#allocation4 + $0xc]]
      %s260 = sadd.s32 %s259, %s57
      %s261 = smul.addr %s260, 16
      %s262 = scalar_lea.hbm %s1, %s261
      %s263 = scalar_lea.vmem %s55, 12
      %s264 = scalar_lea.sflag [#allocation2], 12
      // Predicated region
      $region61: #{ensemble_tgt_emb.1} parent=11 // pred_check
        _
      $region62: #{ensemble_tgt_emb.1} parent=11 // pred_check_branch
        %266 = sbr.rel target = $region64
      $region63: #{ensemble_tgt_emb.1} parent=11 // pred_region
        %267 = sst [smem:[#allocation7]] [#allocation32]
        %268 = sst [smem:[#allocation8]] [#allocation31]
      $region64: #{ensemble_tgt_emb.1} parent=11 // pred_fallthru
        _
      %270 = shalt.err (0)
      %s272 = sshll.u32 %s263, 4
      %s273 = int_to_ptr.vmem [resolvable:$true] %s272
      %275 = dma.hbm_to_vmem [thread:$0]  %s262, 16, %s273, %s264
      %s276 = sld [smem:[#allocation4 + $0xd]]
      %s277 = sadd.s32 %s276, %s57
      %s278 = smul.addr %s277, 16
      %s279 = scalar_lea.hbm %s1, %s278
      %s280 = scalar_lea.vmem %s55, 13
      %s281 = scalar_lea.sflag [#allocation2], 13
      // Predicated region
      $region65: #{ensemble_tgt_emb.1} parent=11 // pred_check
        _
      $region66: #{ensemble_tgt_emb.1} parent=11 // pred_check_branch
        %283 = sbr.rel target = $region68
      $region67: #{ensemble_tgt_emb.1} parent=11 // pred_region
        %284 = sst [smem:[#allocation7]] [#allocation34]
        %285 = sst [smem:[#allocation8]] [#allocation33]
      $region68: #{ensemble_tgt_emb.1} parent=11 // pred_fallthru
        _
      %287 = shalt.err (0)
      %s289 = sshll.u32 %s280, 4
      %s290 = int_to_ptr.vmem [resolvable:$true] %s289
      %292 = dma.hbm_to_vmem [thread:$0]  %s279, 16, %s290, %s281
      %s293 = sld [smem:[#allocation4 + $0xe]]
      %s294 = sadd.s32 %s293, %s57
      %s295 = smul.addr %s294, 16
      %s296 = scalar_lea.hbm %s1, %s295
      %s297 = scalar_lea.vmem %s55, 14
      %s298 = scalar_lea.sflag [#allocation2], 14
      // Predicated region
      $region69: #{ensemble_tgt_emb.1} parent=11 // pred_check
        _
      $region70: #{ensemble_tgt_emb.1} parent=11 // pred_check_branch
        %300 = sbr.rel target = $region72
      $region71: #{ensemble_tgt_emb.1} parent=11 // pred_region
        %301 = sst [smem:[#allocation7]] [#allocation36]
        %302 = sst [smem:[#allocation8]] [#allocation35]
      $region72: #{ensemble_tgt_emb.1} parent=11 // pred_fallthru
        _
      %304 = shalt.err (0)
      %s306 = sshll.u32 %s297, 4
      %s307 = int_to_ptr.vmem [resolvable:$true] %s306
      %309 = dma.hbm_to_vmem [thread:$0]  %s296, 16, %s307, %s298
      %s310 = sld [smem:[#allocation4 + $0xf]]
      %s311 = sadd.s32 %s310, %s57
      %s312 = smul.addr %s311, 16
      %s313 = scalar_lea.hbm %s1, %s312
      %s314 = scalar_lea.vmem %s55, 15
      %s315 = scalar_lea.sflag [#allocation2], 15
      // Predicated region
      $region73: #{ensemble_tgt_emb.1} parent=11 // pred_check
        _
      $region74: #{ensemble_tgt_emb.1} parent=11 // pred_check_branch
        %317 = sbr.rel target = $region76
      $region75: #{ensemble_tgt_emb.1} parent=11 // pred_region
        %318 = sst [smem:[#allocation7]] [#allocation38]
        %319 = sst [smem:[#allocation8]] [#allocation37]
      $region76: #{ensemble_tgt_emb.1} parent=11 // pred_fallthru
        _
      %321 = shalt.err (0)
      %s323 = sshll.u32 %s314, 4
      %s324 = int_to_ptr.vmem [resolvable:$true] %s323
      %326 = dma.hbm_to_vmem [thread:$0]  %s313, 16, %s324, %s315
      %328 = dma.done [#allocation2], 16
      %330 = dma.done %s77, 16
      %332 = dma.done %s94, 16
      %334 = dma.done %s111, 16
      %336 = dma.done %s128, 16
      %338 = dma.done %s145, 16
      %340 = dma.done %s162, 16
      %342 = dma.done %s179, 16
      %344 = dma.done %s196, 16
      %346 = dma.done %s213, 16
      %348 = dma.done %s230, 16
      %350 = dma.done %s247, 16
      %352 = dma.done %s264, 16
      %354 = dma.done %s281, 16
      %356 = dma.done %s298, 16
      %358 = dma.done %s315, 16
      %p359 = scmp.lt.s32.totalorder %s14, 2
      %s360 = scalar_select %p359, %s14, 2
      %s361 = smul.addr %s360, 2
      %s362 = smul.addr %s361, 8
      %s363 = scalar_lea.vmem %s2, %s362
      // Predicated region
      $region77: #{ensemble_tgt_emb.1} parent=11 // pred_check
        %p364 = pneg %p29
      $region78: #{ensemble_tgt_emb.1} parent=11 // pred_check_branch
        %366 = sbr.rel (%p364) target = $region80
      $region79: #{ensemble_tgt_emb.1} parent=11 // pred_region
        _
      $region80: #{ensemble_tgt_emb.1} parent=11 // pred_fallthru
        _
    $region12: #{ensemble_tgt_emb.1} parent=5 // pred_fallthru
      _
    %p367 = scmp.le.s32.totalorder 1, %s14
    // Predicated region
    $region81: #{ensemble_tgt_emb.1} parent=5 // pred_check
      %p368 = pneg %p367
    $region82: #{ensemble_tgt_emb.1} parent=5 // pred_check_branch
      %370 = sbr.rel (%p368) target = $region84
    $region83: #{ensemble_tgt_emb.1} parent=5 // pred_region
      %s371 = ssub.s32 %s14, 1
      // Predicated region
      $region85: #{ensemble_tgt_emb.1} parent=83 // pred_check
        %p372 = pneg %p35
      $region86: #{ensemble_tgt_emb.1} parent=83 // pred_check_branch
        %374 = sbr.rel (%p372) target = $region88
      $region87: #{ensemble_tgt_emb.1} parent=83 // pred_region
        %p375 = scmp.lt.s32.totalorder %s19, 2
        %s376 = scalar_select %p375, %s19, 2
        %s377 = smul.addr %s376, 2
        %s378 = smul.addr %s377, 8
        %s379 = scalar_lea.vmem %s2, %s378
      $region88: #{ensemble_tgt_emb.1} parent=83 // pred_fallthru
        _
    $region84: #{ensemble_tgt_emb.1} parent=5 // pred_fallthru
      _
  $region6: #{ensemble_tgt_emb.1} parent=0 // loop_footer
    %s18 = sadd.s32 1, %s14
  $region7: #{ensemble_tgt_emb.1} parent=0 // loop_footer_branch
    %13 = sbr.rel target = $region3
  $region8: #{ensemble_tgt_emb.1} parent=0 // loop_exit
    _
  %380 = vsyncmov [#allocation2]
  %s381 = vpop.sfrf %380
  %p382 = scmp.eq.s32.totalorder %s381, 0
  %p383 = pneg %p382
  %385 = shalt.err (%p383)
  %s386 = scalar_lea.sflag [#allocation2], 1
  %387 = vsyncmov %s386
  %s388 = vpop.sfrf %387
  %p389 = scmp.eq.s32.totalorder %s388, 0
  %p390 = pneg %p389
  %392 = shalt.err (%p390)
  %s393 = scalar_lea.sflag [#allocation2], 2
  %394 = vsyncmov %s393
  %s395 = vpop.sfrf %394
  %p396 = scmp.eq.s32.totalorder %s395, 0
  %p397 = pneg %p396
  %399 = shalt.err (%p397)
  %s400 = scalar_lea.sflag [#allocation2], 3
  %401 = vsyncmov %s400
  %s402 = vpop.sfrf %401
  %p403 = scmp.eq.s32.totalorder %s402, 0
  %p404 = pneg %p403
  %406 = shalt.err (%p404)
  %s407 = scalar_lea.sflag [#allocation2], 4
  %408 = vsyncmov %s407
  %s409 = vpop.sfrf %408
  %p410 = scmp.eq.s32.totalorder %s409, 0
  %p411 = pneg %p410
  %413 = shalt.err (%p411)
  %s414 = scalar_lea.sflag [#allocation2], 5
  %415 = vsyncmov %s414
  %s416 = vpop.sfrf %415
  %p417 = scmp.eq.s32.totalorder %s416, 0
  %p418 = pneg %p417
  %420 = shalt.err (%p418)
  %s421 = scalar_lea.sflag [#allocation2], 6
  %422 = vsyncmov %s421
  %s423 = vpop.sfrf %422
  %p424 = scmp.eq.s32.totalorder %s423, 0
  %p425 = pneg %p424
  %427 = shalt.err (%p425)
  %s428 = scalar_lea.sflag [#allocation2], 7
  %429 = vsyncmov %s428
  %s430 = vpop.sfrf %429
  %p431 = scmp.eq.s32.totalorder %s430, 0
  %p432 = pneg %p431
  %434 = shalt.err (%p432)
  %s435 = scalar_lea.sflag [#allocation2], 8
  %436 = vsyncmov %s435
  %s437 = vpop.sfrf %436
  %p438 = scmp.eq.s32.totalorder %s437, 0
  %p439 = pneg %p438
  %441 = shalt.err (%p439)
  %s442 = scalar_lea.sflag [#allocation2], 9
  %443 = vsyncmov %s442
  %s444 = vpop.sfrf %443
  %p445 = scmp.eq.s32.totalorder %s444, 0
  %p446 = pneg %p445
  %448 = shalt.err (%p446)
  %s449 = scalar_lea.sflag [#allocation2], 10
  %450 = vsyncmov %s449
  %s451 = vpop.sfrf %450
  %p452 = scmp.eq.s32.totalorder %s451, 0
  %p453 = pneg %p452
  %455 = shalt.err (%p453)
  %s456 = scalar_lea.sflag [#allocation2], 11
  %457 = vsyncmov %s456
  %s458 = vpop.sfrf %457
  %p459 = scmp.eq.s32.totalorder %s458, 0
  %p460 = pneg %p459
  %462 = shalt.err (%p460)
  %s463 = scalar_lea.sflag [#allocation2], 12
  %464 = vsyncmov %s463
  %s465 = vpop.sfrf %464
  %p466 = scmp.eq.s32.totalorder %s465, 0
  %p467 = pneg %p466
  %469 = shalt.err (%p467)
  %s470 = scalar_lea.sflag [#allocation2], 13
  %471 = vsyncmov %s470
  %s472 = vpop.sfrf %471
  %p473 = scmp.eq.s32.totalorder %s472, 0
  %p474 = pneg %p473
  %476 = shalt.err (%p474)
  %s477 = scalar_lea.sflag [#allocation2], 14
  %478 = vsyncmov %s477
  %s479 = vpop.sfrf %478
  %p480 = scmp.eq.s32.totalorder %s479, 0
  %p481 = pneg %p480
  %483 = shalt.err (%p481)
  %s484 = scalar_lea.sflag [#allocation2], 15
  %485 = vsyncmov %s484
  %s486 = vpop.sfrf %485
  %p487 = scmp.eq.s32.totalorder %s486, 0
  %p488 = pneg %p487
  %490 = shalt.err (%p488)

</llo_original>
